<compile_context>
chip_gen: v7x
topology: tpu7x:2x2x1
jax: 0.10.0
libtpu: 0.0.40
codegen_flags: <defaults>
</compile_context>

<pallas_src>
import functools

import jax
import jax.numpy as jnp
from jax.experimental import pallas as pl
from jax.experimental.pallas import tpu as pltpu

BN_EPS = 1e-5
LEAKY_SLOPE = 0.2
HIDDEN = 64
_VMEM_LIMIT = 32 * 1024 * 1024          # safe on v5e/v6e (128 MiB) and v7x (64 MiB)
_HCACHE_LIMIT = 16 * 1024 * 1024        # fall back to recompute above this


def _hidden_pre_bn(xT_ref, ids_ref, w1in_ref, w1cls_ref):
    """h = W1_in @ x + W1_cls @ onehot(ids), feature-major (H, block_b) f32.

    Linear-1 bias is omitted: training-mode BatchNorm subtracts the batch mean,
    which cancels any constant bias exactly."""
    x = xT_ref[...].astype(jnp.float32)                       # (input_dim, block_b)
    h = jnp.dot(w1in_ref[...], x, preferred_element_type=jnp.float32)   # (H, block_b)
    # Class-label contribution: column label_id of W1_cls per example, expressed
    # as a tiny (H, C) @ (C, block_b) matmul against a one-hot built in VMEM from
    # an iota compare (only 4 bytes/example of label data read from HBM).
    ids = ids_ref[...]                                        # (1, block_b) int32
    class_num = w1cls_ref.shape[1]
    cls_iota = jax.lax.broadcasted_iota(jnp.int32, (class_num, ids.shape[1]), 0)
    onehot = (cls_iota == ids).astype(jnp.float32)            # (C, block_b)
    h = h + jnp.dot(w1cls_ref[...], onehot, preferred_element_type=jnp.float32)
    return h


def _fused_kernel(xT_ref, ids_ref, w1in_ref, w1cls_ref, gamma_ref, beta_ref,
                  w2_ref, b2_ref, o_ref, s_ref, ss_ref, scale_ref, shift_ref,
                  *hcache, inv_batch):
    """Two-phase fused forward. Grid = (phase, batch_block); scratch persists."""
    hcache_ref = hcache[0] if hcache else None
    phase = pl.program_id(0)
    i = pl.program_id(1)
    nb = pl.num_programs(1)
    block_b = o_ref.shape[1]

    # ---- Phase 0: batch statistics (+ h cache) ----
    @pl.when(phase == 0)
    def _stats():
        h = _hidden_pre_bn(xT_ref, ids_ref, w1in_ref, w1cls_ref)   # (H, block_b)
        if hcache_ref is not None:
            off = pl.multiple_of(i * block_b, block_b)
            hcache_ref[:, pl.ds(off, block_b)] = h

        s = jnp.sum(h, axis=1, keepdims=True)                      # (H, 1)
        ss = jnp.sum(h * h, axis=1, keepdims=True)                 # (H, 1)

        @pl.when(i == 0)
        def _init():
            s_ref[...] = s
            ss_ref[...] = ss

        @pl.when(i != 0)
        def _acc():
            s_ref[...] += s
            ss_ref[...] += ss

        # After the last batch block, fold the (biased, training-mode) batch
        # statistics and the BN affine into per-feature scale/shift in VMEM.
        # NOTE: var = E[h^2] - E[h]^2 in f32 (clamped at 0); adequate at the
        # test tolerance, but can lose precision if |mean| >> std.
        @pl.when(i == nb - 1)
        def _fold():
            mean = s_ref[...] * inv_batch
            var = jnp.maximum(ss_ref[...] * inv_batch - mean * mean, 0.0)
            sc = gamma_ref[...] * jax.lax.rsqrt(var + BN_EPS)
            scale_ref[...] = sc
            shift_ref[...] = beta_ref[...] - sc * mean

    # ---- Phase 1: folded BN + LeakyReLU + Linear2 + sigmoid ----
    @pl.when(phase == 1)
    def _apply():
        if hcache_ref is not None:
            off = pl.multiple_of(i * block_b, block_b)
            h = hcache_ref[:, pl.ds(off, block_b)]
        else:
            h = _hidden_pre_bn(xT_ref, ids_ref, w1in_ref, w1cls_ref)
        a = h * scale_ref[...] + shift_ref[...]                    # folded BatchNorm
        a = jnp.where(a >= 0.0, a, LEAKY_SLOPE * a)                # LeakyReLU(0.2)
        # Linear-2 on the (otherwise idle) MXU: (out_dim, H) @ (H, block_b).
        z = jnp.dot(w2_ref[...], a, preferred_element_type=jnp.float32) + b2_ref[...]
        o_ref[...] = (1.0 / (1.0 + jnp.exp(-z))).astype(o_ref.dtype)


def _choose_block_b(batch):
    """Largest 128-multiple block (<= 8192) dividing B, else the full batch."""
    for cand in (8192, 4096, 2048, 1024, 512, 256, 128):
        if batch % cand == 0:
            return cand
    return batch


def discriminator_forward(inp, label_ids, params, *, block_b=None):
    """inp: (B, input_dim) f32, label_ids: (B,) int32 class indices
    (a one-hot `label` maps to label_ids = argmax(label, axis=1)).
    Returns sigmoid probabilities of shape (B, output_dim)."""
    inp = inp.astype(jnp.float32)
    B, input_dim = inp.shape
    w1_in, w1_cls = params["w1_in"], params["w1_cls"]
    gamma, beta = params["gamma"], params["beta"]
    w2, b2 = params["w2"], params["b2"]
    hidden = w1_in.shape[0]
    class_num = w1_cls.shape[1]
    out_dim = w2.shape[0]

    if block_b is None:
        block_b = _choose_block_b(B)
    assert B % block_b == 0, "batch must be divisible by the batch block"
    nb = B // block_b
    grid = (2, nb)                           # (phase, batch block); phase is slowest

    # Cache the hidden pre-activations across phases when they fit in VMEM.
    cache_h = hidden * B * 4 <= _HCACHE_LIMIT

    xT = inp.T                               # (input_dim, B): lane-dense in batch
    ids2d = label_ids.reshape(1, B).astype(jnp.int32)

    if cache_h:
        # Phase 1 reads h from the VMEM cache, so pin the x/ids windows to
        # block 0 during phase 1: x is streamed from HBM exactly once.
        data_idx = lambda p, i: (0, i * (1 - p))
    else:
        data_idx = lambda p, i: (0, i)
    full = lambda p, i: (0, 0)

    scratch = [
        pltpu.VMEM((hidden, 1), jnp.float32),    # sum(h)
        pltpu.VMEM((hidden, 1), jnp.float32),    # sum(h*h)
        pltpu.VMEM((hidden, 1), jnp.float32),    # folded BN scale
        pltpu.VMEM((hidden, 1), jnp.float32),    # folded BN shift
    ]
    if cache_h:
        scratch.append(pltpu.VMEM((hidden, B), jnp.float32))

    outT = pl.pallas_call(
        functools.partial(_fused_kernel, inv_batch=1.0 / B),
        out_shape=jax.ShapeDtypeStruct((out_dim, B), jnp.float32),
        grid=grid,
        in_specs=[
            pl.BlockSpec((input_dim, block_b), data_idx),    # xT
            pl.BlockSpec((1, block_b), data_idx),            # label ids
            pl.BlockSpec((hidden, input_dim), full),         # W1 (input cols)
            pl.BlockSpec((hidden, class_num), full),         # W1 (class cols)
            pl.BlockSpec((hidden, 1), full),                 # gamma
            pl.BlockSpec((hidden, 1), full),                 # beta
            pl.BlockSpec((out_dim, hidden), full),           # W2 (PyTorch layout)
            pl.BlockSpec((out_dim, 1), full),                # b2
        ],
        # During phase 0 every step maps to block 0 (never written -> no garbage
        # writebacks); phase 1 writes each block exactly once.
        out_specs=pl.BlockSpec((out_dim, block_b), lambda p, i: (0, i * p)),
        scratch_shapes=scratch,
        compiler_params=pltpu.CompilerParams(
            dimension_semantics=("arbitrary", "arbitrary"),
            vmem_limit_bytes=_VMEM_LIMIT),
    )(xT, ids2d, w1_in, w1_cls,
      gamma.reshape(hidden, 1), beta.reshape(hidden, 1), w2, b2)

    # Lane-dense (out_dim, B) -> module's (B, out_dim) layout outside the kernel.
    return outT.T


def init_discriminator_params(key, input_dim, output_dim, class_num, hidden=HIDDEN):
    """Mirrors initialize_weights: Linear W ~ N(0, sqrt(2/in_features)), bias = 0,
    BatchNorm gamma = 1, beta = 0. W1 is stored feature-major and pre-split
    (w1_in / w1_cls) so the kernel never needs the concatenated [x | one_hot]
    matrix; W2 keeps PyTorch's (out_features, in_features) layout. The Linear-1
    bias is omitted: BatchNorm cancels it exactly."""
    k1, k2 = jax.random.split(key)
    d_in = input_dim + class_num
    w1 = jax.random.normal(k1, (hidden, d_in), jnp.float32) * jnp.sqrt(2.0 / d_in)
    w2 = jax.random.normal(k2, (output_dim, hidden), jnp.float32) * jnp.sqrt(2.0 / hidden)
    return {
        "w1_in": w1[:, :input_dim],                  # (H, input_dim)
        "w1_cls": w1[:, input_dim:],                 # (H, class_num)
        "gamma": jnp.ones((hidden,), jnp.float32),
        "beta": jnp.zeros((hidden,), jnp.float32),
        "w2": w2,                                    # (out_dim, H)
        "b2": jnp.zeros((output_dim, 1), jnp.float32),
    }


def _reference_forward(inp, label_ids, params):
    """Pure-JAX (XLA) replica of the PyTorch module forward, for validation."""
    class_num = params["w1_cls"].shape[1]
    onehot = jax.nn.one_hot(label_ids, class_num, dtype=jnp.float32)
    x = jnp.concatenate([inp, onehot], axis=1)
    w1 = jnp.concatenate([params["w1_in"], params["w1_cls"]], axis=1)
    h = x @ w1.T                                     # Linear-1 bias is zero
    mean = h.mean(axis=0)
    var = ((h - mean) ** 2).mean(axis=0)             # biased, training-mode BN
    h = (h - mean) * jax.lax.rsqrt(var + BN_EPS) * params["gamma"] + params["beta"]
    h = jnp.where(h >= 0.0, h, LEAKY_SLOPE * h)
    z = h @ params["w2"].T + params["b2"][:, 0]
    return jax.nn.sigmoid(z)


if __name__ == "__main__":
    # Small shapes consistent with the module (tabular input + class label),
    # with a batch big enough to exercise the 2-phase, multi-block grid.
    batch = 256
    input_dim = 16
    class_num = 4
    output_dim = 1

    key = jax.random.PRNGKey(0)
    k_params, k_x, k_lbl = jax.random.split(key, 3)

    params = init_discriminator_params(k_params, input_dim, output_dim, class_num)
    inp = jax.random.normal(k_x, (batch, input_dim), jnp.float32)
    label_ids = jax.random.randint(k_lbl, (batch,), 0, class_num, dtype=jnp.int32)

    fwd = jax.jit(functools.partial(discriminator_forward, block_b=128))
    out = jax.block_until_ready(fwd(inp, label_ids, params))

    assert out.shape == (batch, output_dim)
    assert bool(jnp.all((out >= 0.0) & (out <= 1.0)))

    ref = _reference_forward(inp, label_ids, params)
    max_err = float(jnp.max(jnp.abs(out - ref)))
    assert bool(jnp.allclose(out, ref, atol=1e-2, rtol=1e-2)), max_err

    print("KERNEL_OK")
</pallas_src>

<mosaic_0001>
module attributes {stable_mosaic.version = 11 : i64} {
  func.func @_fused_kernel(%arg0: i32, %arg1: i32, %arg2: memref<16x128xf32, #tpu.memory_space<vmem>>, %arg3: memref<1x128xi32, #tpu.memory_space<vmem>>, %arg4: memref<64x16xf32, #tpu.memory_space<vmem>>, %arg5: memref<64x4xf32, #tpu.memory_space<vmem>>, %arg6: memref<64x1xf32, #tpu.memory_space<vmem>>, %arg7: memref<64x1xf32, #tpu.memory_space<vmem>>, %arg8: memref<1x64xf32, #tpu.memory_space<vmem>>, %arg9: memref<1x1xf32, #tpu.memory_space<vmem>>, %arg10: memref<1x128xf32, #tpu.memory_space<vmem>>, %arg11: memref<64x1xf32, #tpu.memory_space<vmem>>, %arg12: memref<64x1xf32, #tpu.memory_space<vmem>>, %arg13: memref<64x1xf32, #tpu.memory_space<vmem>>, %arg14: memref<64x1xf32, #tpu.memory_space<vmem>>, %arg15: memref<64x256xf32, #tpu.memory_space<vmem>>) attributes {dimension_semantics = [#tpu.dimension_semantics<arbitrary>, #tpu.dimension_semantics<arbitrary>], iteration_bounds = array<i64: 2, 2>, scalar_prefetch = 0 : i64, scratch_operands = 5 : i64, tpu.core_type = #tpu.core_type<tc>, window_params = [{transform_indices = @transform_0, window_bounds = array<i64: 16, 128>}, {transform_indices = @transform_1, window_bounds = array<i64: 1, 128>}, {pipeline_mode = #tpu.pipeline_mode<synchronous>, transform_indices = @transform_2, window_bounds = array<i64: 64, 16>}, {pipeline_mode = #tpu.pipeline_mode<synchronous>, transform_indices = @transform_3, window_bounds = array<i64: 64, 4>}, {pipeline_mode = #tpu.pipeline_mode<synchronous>, transform_indices = @transform_4, window_bounds = array<i64: 64, 1>}, {pipeline_mode = #tpu.pipeline_mode<synchronous>, transform_indices = @transform_5, window_bounds = array<i64: 64, 1>}, {pipeline_mode = #tpu.pipeline_mode<synchronous>, transform_indices = @transform_6, window_bounds = array<i64: 1, 64>}, {pipeline_mode = #tpu.pipeline_mode<synchronous>, transform_indices = @transform_7, window_bounds = array<i64: 1, 1>}, {transform_indices = @transform_8, window_bounds = array<i64: 1, 128>}]} {
    %c0_i32 = arith.constant 0 : i32
    %0 = arith.cmpi eq, %arg0, %c0_i32 : i32
    %1 = arith.extui %0 : i1 to i32
    %c0_i32_0 = arith.constant 0 : i32
    %2 = arith.cmpi ne, %1, %c0_i32_0 : i32
    scf.if %2 {
      %c0 = arith.constant 0 : index
      %c0_2 = arith.constant 0 : index
      %6 = vector.load %arg2[%c0, %c0_2] : memref<16x128xf32, #tpu.memory_space<vmem>>, vector<16x128xf32>
      %c0_3 = arith.constant 0 : index
      %c0_4 = arith.constant 0 : index
      %7 = vector.load %arg4[%c0_3, %c0_4] : memref<64x16xf32, #tpu.memory_space<vmem>>, vector<64x16xf32>
      %cst = arith.constant dense<0.000000e+00> : vector<64x128xf32>
      %8 = tpu.matmul %7, %6, %cst {dimension_numbers = #tpu.dot_dimension_numbers<[1], [0], [0], [1], [0, 0, 1, 1], [], []>} : vector<64x16xf32>, vector<16x128xf32>, vector<64x128xf32> -> vector<64x128xf32>
      %c0_5 = arith.constant 0 : index
      %c0_6 = arith.constant 0 : index
      %9 = vector.load %arg3[%c0_5, %c0_6] : memref<1x128xi32, #tpu.memory_space<vmem>>, vector<1x128xi32>
      %10 = tpu.iota {dimensions = array<i32: 0>} : vector<4x128xi32>
      %11 = vector.broadcast %9 : vector<1x128xi32> to vector<4x128xi32>
      %12 = arith.cmpi eq, %10, %11 : vector<4x128xi32>
      %13 = arith.extui %12 : vector<4x128xi1> to vector<4x128xi32>
      %14 = arith.sitofp %13 : vector<4x128xi32> to vector<4x128xf32>
      %c0_7 = arith.constant 0 : index
      %c0_8 = arith.constant 0 : index
      %15 = vector.load %arg5[%c0_7, %c0_8] : memref<64x4xf32, #tpu.memory_space<vmem>>, vector<64x4xf32>
      %cst_9 = arith.constant dense<0.000000e+00> : vector<64x128xf32>
      %16 = tpu.matmul %15, %14, %cst_9 {dimension_numbers = #tpu.dot_dimension_numbers<[1], [0], [0], [1], [0, 0, 1, 1], [], []>} : vector<64x4xf32>, vector<4x128xf32>, vector<64x128xf32> -> vector<64x128xf32>
      %17 = arith.addf %8, %16 : vector<64x128xf32>
      %c128_i32 = arith.constant 128 : i32
      %18 = arith.muli %arg1, %c128_i32 : i32
      %19 = tpu.assume_multiple %18, 128 : i32
      %c0_10 = arith.constant 0 : index
      %20 = arith.index_cast %19 : i32 to index
      %21 = vector.load %arg15[%c0_10, %20] : memref<64x256xf32, #tpu.memory_space<vmem>>, vector<64x128xf32>
      tpu.vector_store %arg15[%c0_10, %20], %17 {strides = array<i32>} : memref<64x256xf32, #tpu.memory_space<vmem>>, vector<64x128xf32>,
      %cst_11 = arith.constant dense<0.000000e+00> : vector<64xf32>
      %22 = vector.multi_reduction <add>, %17, %cst_11 [1] : vector<64x128xf32> to vector<64xf32>
      %23 = vector.shape_cast %22 : vector<64xf32> to vector<64x1xf32>
      %24 = arith.mulf %17, %17 : vector<64x128xf32>
      %cst_12 = arith.constant dense<0.000000e+00> : vector<64xf32>
      %25 = vector.multi_reduction <add>, %24, %cst_12 [1] : vector<64x128xf32> to vector<64xf32>
      %26 = vector.shape_cast %25 : vector<64xf32> to vector<64x1xf32>
      %c0_i32_13 = arith.constant 0 : i32
      %27 = arith.cmpi eq, %arg1, %c0_i32_13 : i32
      %28 = arith.extui %27 : i1 to i32
      %c0_i32_14 = arith.constant 0 : i32
      %29 = arith.cmpi ne, %28, %c0_i32_14 : i32
      scf.if %29 {
        %c0_19 = arith.constant 0 : index
        %c0_20 = arith.constant 0 : index
        %36 = vector.load %arg11[%c0_19, %c0_20] : memref<64x1xf32, #tpu.memory_space<vmem>>, vector<64x1xf32>
        tpu.vector_store %arg11[%c0_19, %c0_20], %23 {strides = array<i32>} : memref<64x1xf32, #tpu.memory_space<vmem>>, vector<64x1xf32>,
        %c0_21 = arith.constant 0 : index
        %c0_22 = arith.constant 0 : index
        %37 = vector.load %arg12[%c0_21, %c0_22] : memref<64x1xf32, #tpu.memory_space<vmem>>, vector<64x1xf32>
        tpu.vector_store %arg12[%c0_21, %c0_22], %26 {strides = array<i32>} : memref<64x1xf32, #tpu.memory_space<vmem>>, vector<64x1xf32>,
      } else {
      }
      %c0_i32_15 = arith.constant 0 : i32
      %30 = arith.cmpi ne, %arg1, %c0_i32_15 : i32
      %31 = arith.extui %30 : i1 to i32
      %c0_i32_16 = arith.constant 0 : i32
      %32 = arith.cmpi ne, %31, %c0_i32_16 : i32
      scf.if %32 {
        %c0_19 = arith.constant 0 : index
        %c0_20 = arith.constant 0 : index
        %36 = vector.load %arg11[%c0_19, %c0_20] : memref<64x1xf32, #tpu.memory_space<vmem>>, vector<64x1xf32>
        %37 = arith.addf %36, %23 : vector<64x1xf32>
        %c0_21 = arith.constant 0 : index
        %c0_22 = arith.constant 0 : index
        %38 = vector.load %arg11[%c0_21, %c0_22] : memref<64x1xf32, #tpu.memory_space<vmem>>, vector<64x1xf32>
        tpu.vector_store %arg11[%c0_21, %c0_22], %37 {strides = array<i32>} : memref<64x1xf32, #tpu.memory_space<vmem>>, vector<64x1xf32>,
        %c0_23 = arith.constant 0 : index
        %c0_24 = arith.constant 0 : index
        %39 = vector.load %arg12[%c0_23, %c0_24] : memref<64x1xf32, #tpu.memory_space<vmem>>, vector<64x1xf32>
        %40 = arith.addf %39, %26 : vector<64x1xf32>
        %c0_25 = arith.constant 0 : index
        %c0_26 = arith.constant 0 : index
        %41 = vector.load %arg12[%c0_25, %c0_26] : memref<64x1xf32, #tpu.memory_space<vmem>>, vector<64x1xf32>
        tpu.vector_store %arg12[%c0_25, %c0_26], %40 {strides = array<i32>} : memref<64x1xf32, #tpu.memory_space<vmem>>, vector<64x1xf32>,
      } else {
      }
      %c1_i32_17 = arith.constant 1 : i32
      %33 = arith.cmpi eq, %arg1, %c1_i32_17 : i32
      %34 = arith.extui %33 : i1 to i32
      %c0_i32_18 = arith.constant 0 : i32
      %35 = arith.cmpi ne, %34, %c0_i32_18 : i32
      scf.if %35 {
        %c0_19 = arith.constant 0 : index
        %c0_20 = arith.constant 0 : index
        %36 = vector.load %arg11[%c0_19, %c0_20] : memref<64x1xf32, #tpu.memory_space<vmem>>, vector<64x1xf32>
        %cst_21 = arith.constant 3.906250e-03 : f32
        %37 = vector.broadcast %cst_21 : f32 to vector<64x1xf32>
        %38 = arith.mulf %36, %37 : vector<64x1xf32>
        %c0_22 = arith.constant 0 : index
        %c0_23 = arith.constant 0 : index
        %39 = vector.load %arg12[%c0_22, %c0_23] : memref<64x1xf32, #tpu.memory_space<vmem>>, vector<64x1xf32>
        %cst_24 = arith.constant 3.906250e-03 : f32
        %40 = vector.broadcast %cst_24 : f32 to vector<64x1xf32>
        %41 = arith.mulf %39, %40 : vector<64x1xf32>
        %42 = arith.mulf %38, %38 : vector<64x1xf32>
        %43 = arith.subf %41, %42 : vector<64x1xf32>
        %cst_25 = arith.constant 0.000000e+00 : f32
        %44 = vector.broadcast %cst_25 : f32 to vector<64x1xf32>
        %45 = arith.maximumf %43, %44 : vector<64x1xf32>
        %c0_26 = arith.constant 0 : index
        %c0_27 = arith.constant 0 : index
        %46 = vector.load %arg6[%c0_26, %c0_27] : memref<64x1xf32, #tpu.memory_space<vmem>>, vector<64x1xf32>
        %cst_28 = arith.constant 9.99999974E-6 : f32
        %47 = vector.broadcast %cst_28 : f32 to vector<64x1xf32>
        %48 = arith.addf %45, %47 : vector<64x1xf32>
        %49 = math.rsqrt %48 : vector<64x1xf32>
        %50 = arith.mulf %46, %49 : vector<64x1xf32>
        %c0_29 = arith.constant 0 : index
        %c0_30 = arith.constant 0 : index
        %51 = vector.load %arg13[%c0_29, %c0_30] : memref<64x1xf32, #tpu.memory_space<vmem>>, vector<64x1xf32>
        tpu.vector_store %arg13[%c0_29, %c0_30], %50 {strides = array<i32>} : memref<64x1xf32, #tpu.memory_space<vmem>>, vector<64x1xf32>,
        %c0_31 = arith.constant 0 : index
        %c0_32 = arith.constant 0 : index
        %52 = vector.load %arg7[%c0_31, %c0_32] : memref<64x1xf32, #tpu.memory_space<vmem>>, vector<64x1xf32>
        %53 = arith.mulf %50, %38 : vector<64x1xf32>
        %54 = arith.subf %52, %53 : vector<64x1xf32>
        %c0_33 = arith.constant 0 : index
        %c0_34 = arith.constant 0 : index
        %55 = vector.load %arg14[%c0_33, %c0_34] : memref<64x1xf32, #tpu.memory_space<vmem>>, vector<64x1xf32>
        tpu.vector_store %arg14[%c0_33, %c0_34], %54 {strides = array<i32>} : memref<64x1xf32, #tpu.memory_space<vmem>>, vector<64x1xf32>,
      } else {
      }
    } else {
    }
    %c1_i32 = arith.constant 1 : i32
    %3 = arith.cmpi eq, %arg0, %c1_i32 : i32
    %4 = arith.extui %3 : i1 to i32
    %c0_i32_1 = arith.constant 0 : i32
    %5 = arith.cmpi ne, %4, %c0_i32_1 : i32
    scf.if %5 {
      %c128_i32 = arith.constant 128 : i32
      %6 = arith.muli %arg1, %c128_i32 : i32
      %7 = tpu.assume_multiple %6, 128 : i32
      %c0 = arith.constant 0 : index
      %8 = arith.index_cast %7 : i32 to index
      %9 = vector.load %arg15[%c0, %8] : memref<64x256xf32, #tpu.memory_space<vmem>>, vector<64x128xf32>
      %c0_2 = arith.constant 0 : index
      %c0_3 = arith.constant 0 : index
      %10 = vector.load %arg13[%c0_2, %c0_3] : memref<64x1xf32, #tpu.memory_space<vmem>>, vector<64x1xf32>
      %11 = vector.broadcast %10 : vector<64x1xf32> to vector<64x128xf32>
      %12 = arith.mulf %9, %11 : vector<64x128xf32>
      %c0_4 = arith.constant 0 : index
      %c0_5 = arith.constant 0 : index
      %13 = vector.load %arg14[%c0_4, %c0_5] : memref<64x1xf32, #tpu.memory_space<vmem>>, vector<64x1xf32>
      %14 = vector.broadcast %13 : vector<64x1xf32> to vector<64x128xf32>
      %15 = arith.addf %12, %14 : vector<64x128xf32>
      %cst = arith.constant 0.000000e+00 : f32
      %16 = vector.broadcast %cst : f32 to vector<64x128xf32>
      %17 = arith.cmpf oge, %15, %16 : vector<64x128xf32>
      %cst_6 = arith.constant 2.000000e-01 : f32
      %18 = vector.broadcast %cst_6 : f32 to vector<64x128xf32>
      %19 = arith.mulf %18, %15 : vector<64x128xf32>
      %20 = arith.select %17, %15, %19 : vector<64x128xi1>, vector<64x128xf32>
      %c0_7 = arith.constant 0 : index
      %c0_8 = arith.constant 0 : index
      %21 = vector.load %arg8[%c0_7, %c0_8] : memref<1x64xf32, #tpu.memory_space<vmem>>, vector<1x64xf32>
      %cst_9 = arith.constant dense<0.000000e+00> : vector<1x128xf32>
      %22 = tpu.matmul %21, %20, %cst_9 {dimension_numbers = #tpu.dot_dimension_numbers<[1], [0], [0], [1], [0, 0, 1, 1], [], []>} : vector<1x64xf32>, vector<64x128xf32>, vector<1x128xf32> -> vector<1x128xf32>
      %c0_10 = arith.constant 0 : index
      %c0_11 = arith.constant 0 : index
      %23 = vector.load %arg9[%c0_10, %c0_11] : memref<1x1xf32, #tpu.memory_space<vmem>>, vector<1x1xf32>
      %24 = vector.broadcast %23 : vector<1x1xf32> to vector<1x128xf32>
      %25 = arith.addf %22, %24 : vector<1x128xf32>
      %cst_12 = arith.constant 0.000000e+00 : f32
      %26 = vector.broadcast %cst_12 : f32 to vector<1x128xf32>
      %27 = arith.subf %26, %25 : vector<1x128xf32>
      %28 = math.exp %27 : vector<1x128xf32>
      %cst_13 = arith.constant 1.000000e+00 : f32
      %29 = vector.broadcast %cst_13 : f32 to vector<1x128xf32>
      %30 = arith.addf %29, %28 : vector<1x128xf32>
      %cst_14 = arith.constant 1.000000e+00 : f32
      %31 = vector.broadcast %cst_14 : f32 to vector<1x128xf32>
      %32 = arith.divf %31, %30 : vector<1x128xf32>
      %c0_15 = arith.constant 0 : index
      %c0_16 = arith.constant 0 : index
      %33 = vector.load %arg10[%c0_15, %c0_16] : memref<1x128xf32, #tpu.memory_space<vmem>>, vector<1x128xf32>
      tpu.vector_store %arg10[%c0_15, %c0_16], %32 {strides = array<i32>} : memref<1x128xf32, #tpu.memory_space<vmem>>, vector<1x128xf32>,
    } else {
    }
    return
  }
  func.func @transform_0(%arg0: i32, %arg1: i32) -> (i32, i32) {
    %c1_i32 = arith.constant 1 : i32
    %0 = arith.subi %c1_i32, %arg0 : i32
    %1 = arith.muli %arg1, %0 : i32
    %c0_i32 = arith.constant 0 : i32
    %c0_i32_0 = arith.constant 0 : i32
    return %c0_i32, %1 : i32, i32
  }
  func.func @transform_1(%arg0: i32, %arg1: i32) -> (i32, i32) {
    %c1_i32 = arith.constant 1 : i32
    %0 = arith.subi %c1_i32, %arg0 : i32
    %1 = arith.muli %arg1, %0 : i32
    %c0_i32 = arith.constant 0 : i32
    %c0_i32_0 = arith.constant 0 : i32
    return %c0_i32, %1 : i32, i32
  }
  func.func @transform_2(%arg0: i32, %arg1: i32) -> (i32, i32) {
    %c0_i32 = arith.constant 0 : i32
    %c0_i32_0 = arith.constant 0 : i32
    %c0_i32_1 = arith.constant 0 : i32
    return %c0_i32, %c0_i32_0 : i32, i32
  }
  func.func @transform_3(%arg0: i32, %arg1: i32) -> (i32, i32) {
    %c0_i32 = arith.constant 0 : i32
    %c0_i32_0 = arith.constant 0 : i32
    %c0_i32_1 = arith.constant 0 : i32
    return %c0_i32, %c0_i32_0 : i32, i32
  }
  func.func @transform_4(%arg0: i32, %arg1: i32) -> (i32, i32) {
    %c0_i32 = arith.constant 0 : i32
    %c0_i32_0 = arith.constant 0 : i32
    %c0_i32_1 = arith.constant 0 : i32
    return %c0_i32, %c0_i32_0 : i32, i32
  }
  func.func @transform_5(%arg0: i32, %arg1: i32) -> (i32, i32) {
    %c0_i32 = arith.constant 0 : i32
    %c0_i32_0 = arith.constant 0 : i32
    %c0_i32_1 = arith.constant 0 : i32
    return %c0_i32, %c0_i32_0 : i32, i32
  }
  func.func @transform_6(%arg0: i32, %arg1: i32) -> (i32, i32) {
    %c0_i32 = arith.constant 0 : i32
    %c0_i32_0 = arith.constant 0 : i32
    %c0_i32_1 = arith.constant 0 : i32
    return %c0_i32, %c0_i32_0 : i32, i32
  }
  func.func @transform_7(%arg0: i32, %arg1: i32) -> (i32, i32) {
    %c0_i32 = arith.constant 0 : i32
    %c0_i32_0 = arith.constant 0 : i32
    %c0_i32_1 = arith.constant 0 : i32
    return %c0_i32, %c0_i32_0 : i32, i32
  }
  func.func @transform_8(%arg0: i32, %arg1: i32) -> (i32, i32) {
    %0 = arith.muli %arg1, %arg0 : i32
    %c0_i32 = arith.constant 0 : i32
    %c0_i32_0 = arith.constant 0 : i32
    return %c0_i32, %0 : i32, i32
  }
}

</mosaic_0001>

<llo_original>
// kernel: discriminator_forward.1
$region0: #{discriminator_forward.1}
  #allocation0 [shape = 'u32[]', space=smem, size = 0x4, offset = 0x4, fixed_abs, tag = 'smem constant byte address 0x4 - core index']
  #allocation1 [shape = 'u32[144,128]{1,0:T(1,128)}', space=vmem, size = 0x12000, scoped, tag = 'internal scratch']
  #allocation2 [shape = 'f32[64,1]{1,0:T(8,128)}', space=vmem, size = 0x8000, scoped, tag = 'scratch operand']
  #allocation3 [shape = 'f32[64,1]{1,0:T(8,128)}', space=vmem, size = 0x8000, scoped, tag = 'scratch operand']
  #allocation4 [shape = 'f32[64,1]{1,0:T(8,128)}', space=vmem, size = 0x8000, scoped, tag = 'scratch operand']
  #allocation5 [shape = 'f32[64,1]{1,0:T(8,128)}', space=vmem, size = 0x8000, scoped, tag = 'scratch operand']
  #allocation6 [shape = 'f32[64,256]{1,0:T(8,128)}', space=vmem, size = 0x10000, scoped, tag = 'scratch operand']
  #allocation7 [shape = 'f32[1,1]{1,0:T(1,128)S(1)}', space=vmem, size = 0x200, scoped, tag = 'scoped memory for discriminator_forward.1']
  %s0 = inlined_call_operand.vmem [shape: f32[16,256], index: 0, kind: input, shape index: {}]
  %s1 = inlined_call_operand.vmem [shape: s32[1,256], index: 1, kind: input, shape index: {}]
  %s2 = inlined_call_operand.vmem [shape: f32[64,16], index: 2, kind: input, shape index: {}]
  %s3 = inlined_call_operand.vmem [shape: f32[64,4], index: 3, kind: input, shape index: {}]
  %s4 = inlined_call_operand.vmem [shape: f32[64,1], index: 4, kind: input, shape index: {}]
  %s5 = inlined_call_operand.vmem [shape: f32[64,1], index: 5, kind: input, shape index: {}]
  %s6 = inlined_call_operand.vmem [shape: f32[1,64], index: 6, kind: input, shape index: {}]
  %s7 = inlined_call_operand.<no memory space> [shape: f32[1,1], index: 7, kind: input, shape index: {}]
  %s8 = inlined_call_operand.hbm [shape: f32[1,256], index: 8, kind: output, shape index: {}]
  %s9 = sld [smem:[#allocation0]]
  $region123: #{discriminator_forward.1} parent=0
    _
  %s11 = ssub.s32 1, %s9
  %s12 = scalar_select 0, %s11, %s9
  %v13 = vstv %s7
  %14 = vst [vmem:[#allocation7] sm:$0x1] %v13
  $region1: #{discriminator_forward.1} parent=0
    #allocation8 [shape = 'u8[16384]{0}', space=vmem, size = 0x4000, scoped, tag = 'input window, operand 0']
    #allocation9 [shape = 'u8[1024]{0}', space=vmem, size = 0x400, scoped, tag = 'output window, operand 0']
    #allocation10 [shape = 's32[2]{0}', space=sflag, size = 0x8, scoped, tag = 'scoped memory for discriminator_forward.1']
    %15 = vsyncpa [#allocation10], 0
    %s16 = scalar_lea.sflag [#allocation10], 1
    %17 = vsyncpa %s16, 0
    loop: start=0, step=1, limit=6
    $region2: #{discriminator_forward.1} parent=1 // loop_pre_header
      _
    $region3: #{discriminator_forward.1} parent=1 // loop_header
      %s19 = sphi 0, %s23
      %p20 = scmp.ge.s32.totalorder %s19, 6
      %s26 = sphi 0, %s38
      %s27 = sphi 0, %s34
      %s28 = sphi 0, %s26
      %s29 = sphi 0, %s27
      %s30 = sphi 0, %s28
      %s31 = sphi 0, %s29
      %s45 = sphi 0, %s47
      %s48 = sphi 0, %s45
      %s49 = sphi 0, %s48
      %s65 = sphi 0, %s49
      %s75 = sphi 0, %s77
      %s78 = sphi 0, %s75
      %s79 = sphi 0, %s78
      %s95 = sphi 0, %s79
      %s99 = sphi 0, %s99
      %s101 = sphi 0, %s99
      %s102 = sphi 0, %s101
      %s116 = sphi 0, %s102
      %s120 = sphi 0, %s120
      %s122 = sphi 0, %s120
      %s123 = sphi 0, %s122
      %s137 = sphi 0, %s123
      %s141 = sphi 0, %s141
      %s143 = sphi 0, %s141
      %s144 = sphi 0, %s143
      %s158 = sphi 0, %s144
      %s162 = sphi 0, %s162
      %s164 = sphi 0, %s162
      %s165 = sphi 0, %s164
      %s179 = sphi 0, %s165
      %s183 = sphi 0, %s183
      %s185 = sphi 0, %s183
      %s186 = sphi 0, %s185
      %s200 = sphi 0, %s186
      %s204 = sphi 0, %s204
      %s206 = sphi 0, %s204
      %s207 = sphi 0, %s206
      %s221 = sphi 0, %s207
      %s229 = sphi 0, %s231
      %s232 = sphi 0, %s229
      %s233 = sphi 0, %s232
      %s249 = sphi 0, %s233
    $region4: #{discriminator_forward.1} parent=1 // loop_header_branch
      %22 = sbr.rel (%p20) target = $region8
    $region5: #{discriminator_forward.1} parent=1 // loop_body
      %s24 = ssub.s32 %s19, 1
      %s25 = ssub.s32 %s19, 2
      %s32 = sadd.s32 1, %s27
      %p33 = scmp.ge.s32.totalorder %s32, 2
      %s34 = scalar_select %p33, 0, %s32
      %s35 = sadd.s32 1, %s26
      %s36 = scalar_select %p33, %s35, %s26
      %p37 = scmp.ge.s32.totalorder %s36, 2
      %s38 = scalar_select %p37, 0, %s36
      %s39 = ssub.s32 1, %s26
      %s40 = smul.u32 %s27, %s39
      %s41 = ssub.s32 1, %s38
      %s42 = smul.u32 %s34, %s41
      %s43 = ssub.s32 %s40, %s42
      %p44 = scmp.eq.s32.totalorder %s43, 0
      %s46 = sadd.s32 %s45, 1
      %s47 = scalar_select %p44, %s45, %s46
      %p50 = pneg %p44
      %p51 = scmp.eq.s32.totalorder %s19, 3
      %p52 = por %p50, %p51
      %p53 = scmp.ne.s32.totalorder %s45, %s48
      %p54 = scmp.eq.s32.totalorder %s19, 0
      %p55 = por %p53, %p54
      %p56 = scmp.ne.s32.totalorder %s45, %s48
      %p57 = scmp.eq.s32.totalorder %s24, 3
      %p58 = por %p56, %p57
      %p59 = scmp.ne.s32.totalorder %s48, %s49
      %p60 = scmp.eq.s32.totalorder %s24, 0
      %p61 = por %p59, %p60
      %p62 = scmp.ne.s32.totalorder %s48, %s49
      %p63 = scmp.eq.s32.totalorder %s25, 3
      %p64 = por %p62, %p63
      %p66 = scmp.ne.s32.totalorder %s49, %s65
      %p67 = scmp.eq.s32.totalorder %s25, 0
      %p68 = por %p66, %p67
      %s69 = ssub.s32 1, %s26
      %s70 = smul.u32 %s27, %s69
      %s71 = ssub.s32 1, %s38
      %s72 = smul.u32 %s34, %s71
      %s73 = ssub.s32 %s70, %s72
      %p74 = scmp.eq.s32.totalorder %s73, 0
      %s76 = sadd.s32 %s75, 1
      %s77 = scalar_select %p74, %s75, %s76
      %p80 = pneg %p74
      %p81 = scmp.eq.s32.totalorder %s19, 3
      %p82 = por %p80, %p81
      %p83 = scmp.ne.s32.totalorder %s75, %s78
      %p84 = scmp.eq.s32.totalorder %s19, 0
      %p85 = por %p83, %p84
      %p86 = scmp.ne.s32.totalorder %s75, %s78
      %p87 = scmp.eq.s32.totalorder %s24, 3
      %p88 = por %p86, %p87
      %p89 = scmp.ne.s32.totalorder %s78, %s79
      %p90 = scmp.eq.s32.totalorder %s24, 0
      %p91 = por %p89, %p90
      %p92 = scmp.ne.s32.totalorder %s78, %s79
      %p93 = scmp.eq.s32.totalorder %s25, 3
      %p94 = por %p92, %p93
      %p96 = scmp.ne.s32.totalorder %s79, %s95
      %p97 = scmp.eq.s32.totalorder %s25, 0
      %p98 = por %p96, %p97
      %s100 = sadd.s32 %s99, 1
      %p103 = scmp.eq.s32.totalorder %s19, 3
      %p104 = scmp.ne.s32.totalorder %s99, %s101
      %p105 = scmp.eq.s32.totalorder %s19, 0
      %p106 = por %p104, %p105
      %p107 = scmp.ne.s32.totalorder %s99, %s101
      %p108 = scmp.eq.s32.totalorder %s24, 3
      %p109 = por %p107, %p108
      %p110 = scmp.ne.s32.totalorder %s101, %s102
      %p111 = scmp.eq.s32.totalorder %s24, 0
      %p112 = por %p110, %p111
      %p113 = scmp.ne.s32.totalorder %s101, %s102
      %p114 = scmp.eq.s32.totalorder %s25, 3
      %p115 = por %p113, %p114
      %p117 = scmp.ne.s32.totalorder %s102, %s116
      %p118 = scmp.eq.s32.totalorder %s25, 0
      %p119 = por %p117, %p118
      %s121 = sadd.s32 %s120, 1
      %p124 = scmp.eq.s32.totalorder %s19, 3
      %p125 = scmp.ne.s32.totalorder %s120, %s122
      %p126 = scmp.eq.s32.totalorder %s19, 0
      %p127 = por %p125, %p126
      %p128 = scmp.ne.s32.totalorder %s120, %s122
      %p129 = scmp.eq.s32.totalorder %s24, 3
      %p130 = por %p128, %p129
      %p131 = scmp.ne.s32.totalorder %s122, %s123
      %p132 = scmp.eq.s32.totalorder %s24, 0
      %p133 = por %p131, %p132
      %p134 = scmp.ne.s32.totalorder %s122, %s123
      %p135 = scmp.eq.s32.totalorder %s25, 3
      %p136 = por %p134, %p135
      %p138 = scmp.ne.s32.totalorder %s123, %s137
      %p139 = scmp.eq.s32.totalorder %s25, 0
      %p140 = por %p138, %p139
      %s142 = sadd.s32 %s141, 1
      %p145 = scmp.eq.s32.totalorder %s19, 3
      %p146 = scmp.ne.s32.totalorder %s141, %s143
      %p147 = scmp.eq.s32.totalorder %s19, 0
      %p148 = por %p146, %p147
      %p149 = scmp.ne.s32.totalorder %s141, %s143
      %p150 = scmp.eq.s32.totalorder %s24, 3
      %p151 = por %p149, %p150
      %p152 = scmp.ne.s32.totalorder %s143, %s144
      %p153 = scmp.eq.s32.totalorder %s24, 0
      %p154 = por %p152, %p153
      %p155 = scmp.ne.s32.totalorder %s143, %s144
      %p156 = scmp.eq.s32.totalorder %s25, 3
      %p157 = por %p155, %p156
      %p159 = scmp.ne.s32.totalorder %s144, %s158
      %p160 = scmp.eq.s32.totalorder %s25, 0
      %p161 = por %p159, %p160
      %s163 = sadd.s32 %s162, 1
      %p166 = scmp.eq.s32.totalorder %s19, 3
      %p167 = scmp.ne.s32.totalorder %s162, %s164
      %p168 = scmp.eq.s32.totalorder %s19, 0
      %p169 = por %p167, %p168
      %p170 = scmp.ne.s32.totalorder %s162, %s164
      %p171 = scmp.eq.s32.totalorder %s24, 3
      %p172 = por %p170, %p171
      %p173 = scmp.ne.s32.totalorder %s164, %s165
      %p174 = scmp.eq.s32.totalorder %s24, 0
      %p175 = por %p173, %p174
      %p176 = scmp.ne.s32.totalorder %s164, %s165
      %p177 = scmp.eq.s32.totalorder %s25, 3
      %p178 = por %p176, %p177
      %p180 = scmp.ne.s32.totalorder %s165, %s179
      %p181 = scmp.eq.s32.totalorder %s25, 0
      %p182 = por %p180, %p181
      %s184 = sadd.s32 %s183, 1
      %p187 = scmp.eq.s32.totalorder %s19, 3
      %p188 = scmp.ne.s32.totalorder %s183, %s185
      %p189 = scmp.eq.s32.totalorder %s19, 0
      %p190 = por %p188, %p189
      %p191 = scmp.ne.s32.totalorder %s183, %s185
      %p192 = scmp.eq.s32.totalorder %s24, 3
      %p193 = por %p191, %p192
      %p194 = scmp.ne.s32.totalorder %s185, %s186
      %p195 = scmp.eq.s32.totalorder %s24, 0
      %p196 = por %p194, %p195
      %p197 = scmp.ne.s32.totalorder %s185, %s186
      %p198 = scmp.eq.s32.totalorder %s25, 3
      %p199 = por %p197, %p198
      %p201 = scmp.ne.s32.totalorder %s186, %s200
      %p202 = scmp.eq.s32.totalorder %s25, 0
      %p203 = por %p201, %p202
      %s205 = sadd.s32 %s204, 1
      %p208 = scmp.eq.s32.totalorder %s19, 3
      %p209 = scmp.ne.s32.totalorder %s204, %s206
      %p210 = scmp.eq.s32.totalorder %s19, 0
      %p211 = por %p209, %p210
      %p212 = scmp.ne.s32.totalorder %s204, %s206
      %p213 = scmp.eq.s32.totalorder %s24, 3
      %p214 = por %p212, %p213
      %p215 = scmp.ne.s32.totalorder %s206, %s207
      %p216 = scmp.eq.s32.totalorder %s24, 0
      %p217 = por %p215, %p216
      %p218 = scmp.ne.s32.totalorder %s206, %s207
      %p219 = scmp.eq.s32.totalorder %s25, 3
      %p220 = por %p218, %p219
      %p222 = scmp.ne.s32.totalorder %s207, %s221
      %p223 = scmp.eq.s32.totalorder %s25, 0
      %p224 = por %p222, %p223
      %s225 = smul.u32 %s27, %s26
      %s226 = smul.u32 %s34, %s38
      %s227 = ssub.s32 %s225, %s226
      %p228 = scmp.eq.s32.totalorder %s227, 0
      %s230 = sadd.s32 %s229, 1
      %s231 = scalar_select %p228, %s229, %s230
      %p234 = pneg %p228
      %p235 = scmp.eq.s32.totalorder %s19, 3
      %p236 = por %p234, %p235
      %p237 = scmp.ne.s32.totalorder %s229, %s232
      %p238 = scmp.eq.s32.totalorder %s19, 0
      %p239 = por %p237, %p238
      %p240 = scmp.ne.s32.totalorder %s229, %s232
      %p241 = scmp.eq.s32.totalorder %s24, 3
      %p242 = por %p240, %p241
      %p243 = scmp.ne.s32.totalorder %s232, %s233
      %p244 = scmp.eq.s32.totalorder %s24, 0
      %p245 = por %p243, %p244
      %p246 = scmp.ne.s32.totalorder %s232, %s233
      %p247 = scmp.eq.s32.totalorder %s25, 3
      %p248 = por %p246, %p247
      %p250 = scmp.ne.s32.totalorder %s233, %s249
      %p251 = scmp.eq.s32.totalorder %s25, 0
      %p252 = por %p250, %p251
      %p253 = scmp.le.s32.totalorder 1, %s19
      %p254 = scmp.lt.s32.totalorder %s19, 5
      %p255 = pnand %p253, %p254
      %p256 = pneg %p255
      // Predicated region
      $region9: #{discriminator_forward.1} parent=5 // pred_check
        _
      $region10: #{discriminator_forward.1} parent=5 // pred_check_branch
        %258 = sbr.rel (%p255) target = $region12
      $region11: #{discriminator_forward.1} parent=5 // pred_region
        %s259 = ssub.s32 %s19, 1
        // Predicated region
        $region13: #{discriminator_forward.1} parent=11 // pred_check
          %p260 = pneg %p112
        $region14: #{discriminator_forward.1} parent=11 // pred_check_branch
          %262 = sbr.rel (%p260) target = $region16
        $region15: #{discriminator_forward.1} parent=11 // pred_region
          _
        $region16: #{discriminator_forward.1} parent=11 // pred_fallthru
          _
        // Predicated region
        $region17: #{discriminator_forward.1} parent=11 // pred_check
          %p263 = pneg %p133
        $region18: #{discriminator_forward.1} parent=11 // pred_check_branch
          %265 = sbr.rel (%p263) target = $region20
        $region19: #{discriminator_forward.1} parent=11 // pred_region
          _
        $region20: #{discriminator_forward.1} parent=11 // pred_fallthru
          _
        // Predicated region
        $region21: #{discriminator_forward.1} parent=11 // pred_check
          %p266 = pneg %p154
        $region22: #{discriminator_forward.1} parent=11 // pred_check_branch
          %268 = sbr.rel (%p266) target = $region24
        $region23: #{discriminator_forward.1} parent=11 // pred_region
          _
        $region24: #{discriminator_forward.1} parent=11 // pred_fallthru
          _
        // Predicated region
        $region25: #{discriminator_forward.1} parent=11 // pred_check
          %p269 = pneg %p175
        $region26: #{discriminator_forward.1} parent=11 // pred_check_branch
          %271 = sbr.rel (%p269) target = $region28
        $region27: #{discriminator_forward.1} parent=11 // pred_region
          _
        $region28: #{discriminator_forward.1} parent=11 // pred_fallthru
          _
        // Predicated region
        $region29: #{discriminator_forward.1} parent=11 // pred_check
          %p272 = pneg %p196
        $region30: #{discriminator_forward.1} parent=11 // pred_check_branch
          %274 = sbr.rel (%p272) target = $region32
        $region31: #{discriminator_forward.1} parent=11 // pred_region
          _
        $region32: #{discriminator_forward.1} parent=11 // pred_fallthru
          _
        // Predicated region
        $region33: #{discriminator_forward.1} parent=11 // pred_check
          %p275 = pneg %p217
        $region34: #{discriminator_forward.1} parent=11 // pred_check_branch
          %277 = sbr.rel (%p275) target = $region36
        $region35: #{discriminator_forward.1} parent=11 // pred_region
          _
        $region36: #{discriminator_forward.1} parent=11 // pred_fallthru
          _
      $region12: #{discriminator_forward.1} parent=5 // pred_fallthru
        _
      %p278 = scmp.lt.s32.totalorder %s19, 4
      // Predicated region
      $region37: #{discriminator_forward.1} parent=5 // pred_check
        %p279 = pneg %p278
      $region38: #{discriminator_forward.1} parent=5 // pred_check_branch
        %281 = sbr.rel (%p279) target = $region40
      $region39: #{discriminator_forward.1} parent=5 // pred_region
        // Predicated region
        $region41: #{discriminator_forward.1} parent=39 // pred_check
          %p282 = pneg %p55
        $region42: #{discriminator_forward.1} parent=39 // pred_check_branch
          %284 = sbr.rel (%p282) target = $region44
        $region43: #{discriminator_forward.1} parent=39 // pred_region
          %s285 = sand.u32 %s45, 1
          %s286 = sand.u32 %s45, 1
          %s287 = smul.addr %s286, 16
          %s288 = scalar_lea.vmem [#allocation8], %s287
          %s289 = ssub.s32 1, %s26
          %s290 = smul.u32 %s27, %s289
          %s291 = smul.addr %s290, 8
          %s292 = scalar_lea.vmem %s0, %s291
          // Predicated region
          $region45: #{discriminator_forward.1} parent=43 // pred_check
            _
          $region46: #{discriminator_forward.1} parent=43 // pred_check_branch
            %294 = sbr.rel (0) target = $region48
          $region47: #{discriminator_forward.1} parent=43 // pred_region
            // Predicated region
            $region49: #{discriminator_forward.1} parent=47 // pred_check
              _
            $region50: #{discriminator_forward.1} parent=47 // pred_check_branch
              %296 = sbr.rel (0) target = $region52
            $region51: #{discriminator_forward.1} parent=47 // pred_region
              // Predicated region
              $region64: #{discriminator_forward.1} parent=51 // pred_check
                _
              $region65: #{discriminator_forward.1} parent=51 // pred_check_branch
                %313 = sbr.rel (0) target = $region67
              $region66: #{discriminator_forward.1} parent=51 // pred_region
                loop: start=0, step=1, limit=1
                $region68: #{discriminator_forward.1} parent=66 // loop_pre_header
                  _
                $region69: #{discriminator_forward.1} parent=66 // loop_header
                  %s315 = sphi 0, %s319
                  %p316 = scmp.ge.s32.totalorder %s315, 1
                  %s320 = sphi %s292, %s292
                  %s321 = sphi %s288, %s288
                $region70: #{discriminator_forward.1} parent=66 // loop_header_branch
                  %318 = sbr.rel (%p316) target = $region74
                $region71: #{discriminator_forward.1} parent=66 // loop_body
                  %v322 = vld [vmem:[%s320] sm:$0xff]
                  %323 = vst [vmem:[%s321] sm:$0xff] %v322
                  %v324 = vld [vmem:[%s320 + $0x10] sm:$0xff]
                  %325 = vst [vmem:[%s321 + $0x8] sm:$0xff] %v324
                $region72: #{discriminator_forward.1} parent=66 // loop_footer
                  %s319 = sadd.s32 1, %s315
                $region73: #{discriminator_forward.1} parent=66 // loop_footer_branch
                  %314 = sbr.rel target = $region69
                $region74: #{discriminator_forward.1} parent=66 // loop_exit
                  _
              $region67: #{discriminator_forward.1} parent=51 // pred_fallthru
                _
              // Predicated region
              $region75: #{discriminator_forward.1} parent=51 // pred_check
                _
              $region76: #{discriminator_forward.1} parent=51 // pred_check_branch
                %327 = sbr.rel target = $region78
              $region77: #{discriminator_forward.1} parent=51 // pred_region
                _
              $region78: #{discriminator_forward.1} parent=51 // pred_fallthru
                _
            $region52: #{discriminator_forward.1} parent=47 // pred_fallthru
              _
            // Predicated region
            $region53: #{discriminator_forward.1} parent=47 // pred_check
              _
            $region54: #{discriminator_forward.1} parent=47 // pred_check_branch
              %298 = sbr.rel target = $region56
            $region55: #{discriminator_forward.1} parent=47 // pred_region
              loop: start=0, step=1, limit=1
              $region57: #{discriminator_forward.1} parent=55 // loop_pre_header
                _
              $region58: #{discriminator_forward.1} parent=55 // loop_header
                %s301 = sphi 0, %s305
                %p302 = scmp.ge.s32.totalorder %s301, 1
                %s306 = sphi %s292, %s292
                %s307 = sphi %s288, %s288
              $region59: #{discriminator_forward.1} parent=55 // loop_header_branch
                %304 = sbr.rel (%p302) target = $region63
              $region60: #{discriminator_forward.1} parent=55 // loop_body
                %v308 = vld [vmem:[%s306] sm:$0xff]
                %309 = vst [vmem:[%s307] sm:$0xff] %v308
                %v310 = vld [vmem:[%s306 + $0x10] sm:$0xff]
                %311 = vst [vmem:[%s307 + $0x8] sm:$0xff] %v310
              $region61: #{discriminator_forward.1} parent=55 // loop_footer
                %s305 = sadd.s32 1, %s301
              $region62: #{discriminator_forward.1} parent=55 // loop_footer_branch
                %300 = sbr.rel target = $region58
              $region63: #{discriminator_forward.1} parent=55 // loop_exit
                _
            $region56: #{discriminator_forward.1} parent=47 // pred_fallthru
              _
          $region48: #{discriminator_forward.1} parent=43 // pred_fallthru
            _
          %328 = vnop
        $region44: #{discriminator_forward.1} parent=39 // pred_fallthru
          _
        // Predicated region
        $region79: #{discriminator_forward.1} parent=39 // pred_check
          %p329 = pneg %p85
        $region80: #{discriminator_forward.1} parent=39 // pred_check_branch
          %331 = sbr.rel (%p329) target = $region82
        $region81: #{discriminator_forward.1} parent=39 // pred_region
          %s332 = ssub.s32 1, %s26
          %s333 = smul.u32 %s27, %s332
          %p334 = scmp.lt.s32.totalorder %s333, 1
          %s335 = scalar_select %p334, %s333, 1
          %s336 = scalar_lea.vmem %s1, %s335
          %s337 = ssub.s32 1, %s26
          %s338 = smul.u32 %s27, %s337
        $region82: #{discriminator_forward.1} parent=39 // pred_fallthru
          _
      $region40: #{discriminator_forward.1} parent=5 // pred_fallthru
        _
      %p339 = scmp.le.s32.totalorder 1, %s19
      %p340 = scmp.lt.s32.totalorder %s19, 5
      %p341 = pnand %p339, %p340
      %p342 = pneg %p341
      // Predicated region
      $region83: #{discriminator_forward.1} parent=5 // pred_check
        _
      $region84: #{discriminator_forward.1} parent=5 // pred_check_branch
        %344 = sbr.rel (%p341) target = $region86
      $region85: #{discriminator_forward.1} parent=5 // pred_region
        %s345 = ssub.s32 %s19, 1
        %s346 = sand.u32 %s48, 1
        %s347 = sand.u32 %s48, 1
        %s348 = smul.addr %s347, 16
        %s349 = scalar_lea.vmem [#allocation8], %s348
        // Predicated region
        $region87: #{discriminator_forward.1} parent=85 // pred_check
          %p350 = pneg %p61
        $region88: #{discriminator_forward.1} parent=85 // pred_check_branch
          %352 = sbr.rel (%p350) target = $region90
        $region89: #{discriminator_forward.1} parent=85 // pred_region
          _
        $region90: #{discriminator_forward.1} parent=85 // pred_fallthru
          _
        %s353 = sand.u32 %s48, 1
        %s354 = sand.u32 %s48, 1
        %s355 = smul.addr %s354, 16
        %s356 = scalar_lea.vmem [#allocation8], %s355
        %p357 = pneg %p61
        %p358 = pneg %p58
        %s359 = ssub.s32 1, %s28
        %s360 = smul.u32 %s29, %s359
        %p361 = scmp.lt.s32.totalorder %s360, 1
        %s362 = scalar_select %p361, %s360, 1
        %s363 = scalar_lea.vmem %s1, %s362
        %p364 = pneg %p91
        %p365 = pneg %p88
        %p366 = pneg %p112
        %p367 = pneg %p109
        %p368 = pneg %p133
        %p369 = pneg %p130
        %p370 = pneg %p154
        %p371 = pneg %p151
        %p372 = pneg %p175
        %p373 = pneg %p172
        %p374 = pneg %p196
        %p375 = pneg %p193
        %p376 = pneg %p217
        %p377 = pneg %p214
        %p378 = pneg %p245
        %p379 = pneg %p242
        %s380 = sand.u32 %s232, 1
        %s381 = scalar_lea.sflag [#allocation10], %s380
        %s382 = sand.u32 %s232, 1
        %s383 = scalar_lea.vmem [#allocation9], %s382
        %s384 = ssub.s32 1, %s28
        %s385 = smul.u32 %s29, %s384
        %s386 = ssub.s32 1, %s28
        %s387 = smul.u32 %s29, %s386
        %p388 = scmp.lt.s32.totalorder %s387, 1
        %s389 = scalar_select %p388, %s387, 1
        %s390 = scalar_lea.vmem %s1, %s389
        %s391 = ssub.s32 1, %s28
        %s392 = smul.u32 %s29, %s391
        %s393 = smul.u32 %s29, %s28
        %p394 = scmp.eq.s32.totalorder %s28, 0
        // Predicated region
        $region91: #{discriminator_forward.1} parent=85 // pred_check
          %p395 = pneg %p394
        $region92: #{discriminator_forward.1} parent=85 // pred_check_branch
          %397 = sbr.rel (%p395) target = $region94
        $region93: #{discriminator_forward.1} parent=85 // pred_region
          %v398 = vld [vmem:[%s349] sm:$0xff]
          %v399 = vld [vmem:[%s349 + $0x8] sm:$0xff]
          %v400 = vld [vmem:[%s2] sm:$0xff]
          %v401 = vld [vmem:[%s2 + $0x8] sm:$0xff]
          %v402 = vld [vmem:[%s2 + $0x10] sm:$0xff]
          %v403 = vld [vmem:[%s2 + $0x18] sm:$0xff]
          %v404 = vld [vmem:[%s2 + $0x20] sm:$0xff]
          %v405 = vld [vmem:[%s2 + $0x28] sm:$0xff]
          %v406 = vld [vmem:[%s2 + $0x30] sm:$0xff]
          %v407 = vld [vmem:[%s2 + $0x38] sm:$0xff]
          %v408 = vld [vmem:[%s390] sm:$0x1]
          %v409 = vlaneseq
          %v410 = vshrl.u32 %v409, 7
          %v411 = vlaneseq
          %v412 = vshrl.u32 %v411, 7
          %v413 = vsub.s32 0, %v412
          %v414 = vrot.slane %v408, %v413
          %vm415 = vcmp.eq.s32.totalorder %v410, %v414
          %v416 = vsel %vm415, 1, 0
          %v417 = vcvt.s32.f32 %v416
          %v418 = vld [vmem:[%s3] sm:$0xff]
          %v419 = vld [vmem:[%s3 + $0x8] sm:$0xff]
          %v420 = vld [vmem:[%s3 + $0x10] sm:$0xff]
          %v421 = vld [vmem:[%s3 + $0x18] sm:$0xff]
          %v422 = vld [vmem:[%s3 + $0x20] sm:$0xff]
          %v423 = vld [vmem:[%s3 + $0x28] sm:$0xff]
          %v424 = vld [vmem:[%s3 + $0x30] sm:$0xff]
          %v425 = vld [vmem:[%s3 + $0x38] sm:$0xff]
          %vm426 = vcmask 31744
          %v428 = vsel %vm426, %v418, 0
          %v431 = vsel %vm426, %v419, 0
          %v434 = vsel %vm426, %v420, 0
          %v437 = vsel %vm426, %v421, 0
          %v440 = vsel %vm426, %v422, 0
          %v443 = vsel %vm426, %v423, 0
          %v446 = vsel %vm426, %v424, 0
          %v449 = vsel %vm426, %v425, 0
          %vm451 = vcmask 1043456
          %v453 = vsel %vm451, %v417, 0
          %455 = vmatprep.subr.mxu0 0.0
          %456 = vmatpush1.msra.mxu0 %v453
          %457 = vmatprep.subr.mxu0 0.0
          %458 = vmatpush1.msra.mxu0 0.0
          %459 = vmatprep.subr.mxu0 0.0
          %460 = vmatpush1.msra.mxu0 0.0
          %461 = vmatprep.subr.mxu0 0.0
          %462 = vmatpush1.msra.mxu0 0.0
          %463 = vmatprep.subr.mxu0 0.0
          %464 = vmatpush1.msra.mxu0 0.0
          %465 = vmatprep.subr.mxu0 0.0
          %466 = vmatpush1.msra.mxu0 0.0
          %467 = vmatprep.subr.mxu0 0.0
          %468 = vmatpush1.msra.mxu0 0.0
          %469 = vmatprep.subr.mxu0 0.0
          %470 = vmatpush1.msra.mxu0 0.0
          %471 = vmatprep.subr.mxu0 0.0
          %472 = vmatpush1.msra.mxu0 0.0
          %473 = vmatprep.subr.mxu0 0.0
          %474 = vmatpush1.msra.mxu0 0.0
          %475 = vmatprep.subr.mxu0 0.0
          %476 = vmatpush1.msra.mxu0 0.0
          %477 = vmatprep.subr.mxu0 0.0
          %478 = vmatpush1.msra.mxu0 0.0
          %479 = vmatprep.subr.mxu0 0.0
          %480 = vmatpush1.msra.mxu0 0.0
          %481 = vmatprep.subr.mxu0 0.0
          %482 = vmatpush1.msra.mxu0 0.0
          %483 = vmatprep.subr.mxu0 0.0
          %484 = vmatpush1.msra.mxu0 0.0
          %485 = vmatprep.subr.mxu0 0.0
          %486 = vmatpush1.msra.mxu0 0.0
          %487 = vmatprep.subr.mxu0 0.0
          %488 = vmatpush1.msra.mxu0 0.0
          %489 = vmatprep.subr.mxu0 0.0
          %490 = vmatpush1.msra.mxu0 0.0
          %491 = vmatprep.subr.mxu0 0.0
          %492 = vmatpush1.msra.mxu0 0.0
          %493 = vmatprep.subr.mxu0 0.0
          %494 = vmatpush1.msra.mxu0 0.0
          %495 = vmatprep.subr.mxu0 0.0
          %496 = vmatpush1.msra.mxu0 0.0
          %497 = vmatprep.subr.mxu0 0.0
          %498 = vmatpush1.msra.mxu0 0.0
          %499 = vmatprep.subr.mxu0 0.0
          %500 = vmatpush1.msra.mxu0 0.0
          %501 = vmatprep.subr.mxu0 0.0
          %502 = vmatpush1.msra.mxu0 0.0
          %503 = vmatprep.subr.mxu0 0.0
          %504 = vmatpush1.msra.mxu0 0.0
          %505 = vmatprep.subr.mxu0 0.0
          %506 = vmatpush1.msra.mxu0 0.0
          %507 = vmatprep.subr.mxu0 0.0
          %508 = vmatpush1.msra.mxu0 0.0
          %509 = vmatprep.subr.mxu0 0.0
          %510 = vmatpush1.msra.mxu0 0.0
          %511 = vmatprep.subr.mxu0 0.0
          %512 = vmatpush1.msra.mxu0 0.0
          %513 = vmatprep.subr.mxu0 0.0
          %514 = vmatpush1.msra.mxu0 0.0
          %515 = vmatprep.subr.mxu0 0.0
          %516 = vmatpush1.msra.mxu0 0.0
          %517 = vmatprep.subr.mxu0 0.0
          %518 = vmatpush1.msra.mxu0 0.0
          %519 = vmatprep.mubr.f32.mxu0 0.0
          %520 = vmatmul.mubr.f32.gmra.mrb[0].mxu0 %v428
          %v521 = vpop.f32.mrb[0].mxu0
          %v522 = vadd.f32 0.0, %v521
          %v523 = vpop.f32.mrb[0].mxu0
          %524 = vmatprep.mubr.f32.mxu0 0.0
          %525 = vmatmul.mubr.f32.gmra.mrb[0].mxu0 %v431
          %v526 = vpop.f32.mrb[0].mxu0
          %v527 = vadd.f32 0.0, %v526
          %v528 = vpop.f32.mrb[0].mxu0
          %529 = vmatprep.mubr.f32.mxu0 0.0
          %530 = vmatmul.mubr.f32.gmra.mrb[0].mxu0 %v434
          %v531 = vpop.f32.mrb[0].mxu0
          %v532 = vadd.f32 0.0, %v531
          %v533 = vpop.f32.mrb[0].mxu0
          %534 = vmatprep.mubr.f32.mxu0 0.0
          %535 = vmatmul.mubr.f32.gmra.mrb[0].mxu0 %v437
          %v536 = vpop.f32.mrb[0].mxu0
          %v537 = vadd.f32 0.0, %v536
          %v538 = vpop.f32.mrb[0].mxu0
          %539 = vmatprep.mubr.f32.mxu0 0.0
          %540 = vmatmul.mubr.f32.gmra.mrb[0].mxu0 %v440
          %v541 = vpop.f32.mrb[0].mxu0
          %v542 = vadd.f32 0.0, %v541
          %v543 = vpop.f32.mrb[0].mxu0
          %544 = vmatprep.mubr.f32.mxu0 0.0
          %545 = vmatmul.mubr.f32.gmra.mrb[0].mxu0 %v443
          %v546 = vpop.f32.mrb[0].mxu0
          %v547 = vadd.f32 0.0, %v546
          %v548 = vpop.f32.mrb[0].mxu0
          %549 = vmatprep.mubr.f32.mxu0 0.0
          %550 = vmatmul.mubr.f32.gmra.mrb[0].mxu0 %v446
          %v551 = vpop.f32.mrb[0].mxu0
          %v552 = vadd.f32 0.0, %v551
          %v553 = vpop.f32.mrb[0].mxu0
          %554 = vmatprep.mubr.f32.mxu0 0.0
          %555 = vmatmul.mubr.f32.gmra.mrb[0].mxu0 %v449
          %v556 = vpop.f32.mrb[0].mxu0
          %v557 = vadd.f32 0.0, %v556
          %v558 = vpop.f32.mrb[0].mxu0
          %559 = vdwg.mxu0
          %vm560 = vcmask 130048
          %v562 = vsel %vm560, %v400, 0
          %v565 = vsel %vm560, %v401, 0
          %v568 = vsel %vm560, %v402, 0
          %v571 = vsel %vm560, %v403, 0
          %v574 = vsel %vm560, %v404, 0
          %v577 = vsel %vm560, %v405, 0
          %v580 = vsel %vm560, %v406, 0
          %v583 = vsel %vm560, %v407, 0
          %585 = vmatprep.subr.mxu0 0.0
          %586 = vmatpush1.msra.mxu0 %v398
          %587 = vmatprep.subr.mxu0 0.0
          %588 = vmatpush1.msra.mxu0 %v399
          %589 = vmatprep.subr.mxu0 0.0
          %590 = vmatpush1.msra.mxu0 0.0
          %591 = vmatprep.subr.mxu0 0.0
          %592 = vmatpush1.msra.mxu0 0.0
          %593 = vmatprep.subr.mxu0 0.0
          %594 = vmatpush1.msra.mxu0 0.0
          %595 = vmatprep.subr.mxu0 0.0
          %596 = vmatpush1.msra.mxu0 0.0
          %597 = vmatprep.subr.mxu0 0.0
          %598 = vmatpush1.msra.mxu0 0.0
          %599 = vmatprep.subr.mxu0 0.0
          %600 = vmatpush1.msra.mxu0 0.0
          %601 = vmatprep.subr.mxu0 0.0
          %602 = vmatpush1.msra.mxu0 0.0
          %603 = vmatprep.subr.mxu0 0.0
          %604 = vmatpush1.msra.mxu0 0.0
          %605 = vmatprep.subr.mxu0 0.0
          %606 = vmatpush1.msra.mxu0 0.0
          %607 = vmatprep.subr.mxu0 0.0
          %608 = vmatpush1.msra.mxu0 0.0
          %609 = vmatprep.subr.mxu0 0.0
          %610 = vmatpush1.msra.mxu0 0.0
          %611 = vmatprep.subr.mxu0 0.0
          %612 = vmatpush1.msra.mxu0 0.0
          %613 = vmatprep.subr.mxu0 0.0
          %614 = vmatpush1.msra.mxu0 0.0
          %615 = vmatprep.subr.mxu0 0.0
          %616 = vmatpush1.msra.mxu0 0.0
          %617 = vmatprep.subr.mxu0 0.0
          %618 = vmatpush1.msra.mxu0 0.0
          %619 = vmatprep.subr.mxu0 0.0
          %620 = vmatpush1.msra.mxu0 0.0
          %621 = vmatprep.subr.mxu0 0.0
          %622 = vmatpush1.msra.mxu0 0.0
          %623 = vmatprep.subr.mxu0 0.0
          %624 = vmatpush1.msra.mxu0 0.0
          %625 = vmatprep.subr.mxu0 0.0
          %626 = vmatpush1.msra.mxu0 0.0
          %627 = vmatprep.subr.mxu0 0.0
          %628 = vmatpush1.msra.mxu0 0.0
          %629 = vmatprep.subr.mxu0 0.0
          %630 = vmatpush1.msra.mxu0 0.0
          %631 = vmatprep.subr.mxu0 0.0
          %632 = vmatpush1.msra.mxu0 0.0
          %633 = vmatprep.subr.mxu0 0.0
          %634 = vmatpush1.msra.mxu0 0.0
          %635 = vmatprep.subr.mxu0 0.0
          %636 = vmatpush1.msra.mxu0 0.0
          %637 = vmatprep.subr.mxu0 0.0
          %638 = vmatpush1.msra.mxu0 0.0
          %639 = vmatprep.subr.mxu0 0.0
          %640 = vmatpush1.msra.mxu0 0.0
          %641 = vmatprep.subr.mxu0 0.0
          %642 = vmatpush1.msra.mxu0 0.0
          %643 = vmatprep.subr.mxu0 0.0
          %644 = vmatpush1.msra.mxu0 0.0
          %645 = vmatprep.subr.mxu0 0.0
          %646 = vmatpush1.msra.mxu0 0.0
          %647 = vmatprep.subr.mxu0 0.0
          %648 = vmatpush1.msra.mxu0 0.0
          %649 = vmatprep.mubr.f32.mxu0 0.0
          %650 = vmatmul.mubr.f32.gmra.mrb[0].mxu0 %v562
          %v651 = vpop.f32.mrb[0].mxu0
          %v652 = vadd.f32 %v522, %v651
          %v653 = vpop.f32.mrb[0].mxu0
          %654 = vmatprep.mubr.f32.mxu0 0.0
          %655 = vmatmul.mubr.f32.gmra.mrb[0].mxu0 %v565
          %v656 = vpop.f32.mrb[0].mxu0
          %v657 = vadd.f32 %v527, %v656
          %v658 = vpop.f32.mrb[0].mxu0
          %659 = vmatprep.mubr.f32.mxu0 0.0
          %660 = vmatmul.mubr.f32.gmra.mrb[0].mxu0 %v568
          %v661 = vpop.f32.mrb[0].mxu0
          %v662 = vadd.f32 %v532, %v661
          %v663 = vpop.f32.mrb[0].mxu0
          %664 = vmatprep.mubr.f32.mxu0 0.0
          %665 = vmatmul.mubr.f32.gmra.mrb[0].mxu0 %v571
          %v666 = vpop.f32.mrb[0].mxu0
          %v667 = vadd.f32 %v537, %v666
          %v668 = vpop.f32.mrb[0].mxu0
          %669 = vmatprep.mubr.f32.mxu0 0.0
          %670 = vmatmul.mubr.f32.gmra.mrb[0].mxu0 %v574
          %v671 = vpop.f32.mrb[0].mxu0
          %v672 = vadd.f32 %v542, %v671
          %v673 = vpop.f32.mrb[0].mxu0
          %674 = vmatprep.mubr.f32.mxu0 0.0
          %675 = vmatmul.mubr.f32.gmra.mrb[0].mxu0 %v577
          %v676 = vpop.f32.mrb[0].mxu0
          %v677 = vadd.f32 %v547, %v676
          %v678 = vpop.f32.mrb[0].mxu0
          %679 = vmatprep.mubr.f32.mxu0 0.0
          %680 = vmatmul.mubr.f32.gmra.mrb[0].mxu0 %v580
          %v681 = vpop.f32.mrb[0].mxu0
          %v682 = vadd.f32 %v552, %v681
          %v683 = vpop.f32.mrb[0].mxu0
          %684 = vmatprep.mubr.f32.mxu0 0.0
          %685 = vmatmul.mubr.f32.gmra.mrb[0].mxu0 %v583
          %v686 = vpop.f32.mrb[0].mxu0
          %v687 = vadd.f32 %v557, %v686
          %v688 = vpop.f32.mrb[0].mxu0
          %689 = vdwg.mxu0
          %s690 = smul.u32 %s29, 128
          %s691 = sshra.s32 %s690, 7
          %s692 = sand.u32 %s690, 127
          %s693 = smul.addr %s691, 8
          %s694 = scalar_lea.vmem [#allocation6], %s693
          %695 = vst [vmem:[%s694] sm:$0xff] %v652
          %696 = vst [vmem:[%s694 + $0x10] sm:$0xff] %v657
          %697 = vst [vmem:[%s694 + $0x20] sm:$0xff] %v662
          %698 = vst [vmem:[%s694 + $0x30] sm:$0xff] %v667
          %699 = vst [vmem:[%s694 + $0x40] sm:$0xff] %v672
          %700 = vst [vmem:[%s694 + $0x50] sm:$0xff] %v677
          %701 = vst [vmem:[%s694 + $0x60] sm:$0xff] %v682
          %702 = vst [vmem:[%s694 + $0x70] sm:$0xff] %v687
          %703 = vadd.xlane.f32.xlu0 %v652
          %v704 = vpop.xlane.xlu0 %703
          %705 = vadd.xlane.f32.xlu0 %v657
          %v706 = vpop.xlane.xlu0 %705
          %707 = vadd.xlane.f32.xlu0 %v662
          %v708 = vpop.xlane.xlu0 %707
          %709 = vadd.xlane.f32.xlu0 %v667
          %v710 = vpop.xlane.xlu0 %709
          %711 = vadd.xlane.f32.xlu0 %v672
          %v712 = vpop.xlane.xlu0 %711
          %713 = vadd.xlane.f32.xlu0 %v677
          %v714 = vpop.xlane.xlu0 %713
          %715 = vadd.xlane.f32.xlu0 %v682
          %v716 = vpop.xlane.xlu0 %715
          %717 = vadd.xlane.f32.xlu0 %v687
          %v718 = vpop.xlane.xlu0 %717
          %v719 = vmul.f32 %v652, %v652
          %v720 = vmul.f32 %v657, %v657
          %v721 = vmul.f32 %v662, %v662
          %v722 = vmul.f32 %v667, %v667
          %v723 = vmul.f32 %v672, %v672
          %v724 = vmul.f32 %v677, %v677
          %v725 = vmul.f32 %v682, %v682
          %v726 = vmul.f32 %v687, %v687
          %727 = vadd.xlane.f32.xlu0 %v719
          %v728 = vpop.xlane.xlu0 %727
          %729 = vadd.xlane.f32.xlu0 %v720
          %v730 = vpop.xlane.xlu0 %729
          %731 = vadd.xlane.f32.xlu0 %v721
          %v732 = vpop.xlane.xlu0 %731
          %733 = vadd.xlane.f32.xlu0 %v722
          %v734 = vpop.xlane.xlu0 %733
          %735 = vadd.xlane.f32.xlu0 %v723
          %v736 = vpop.xlane.xlu0 %735
          %737 = vadd.xlane.f32.xlu0 %v724
          %v738 = vpop.xlane.xlu0 %737
          %739 = vadd.xlane.f32.xlu0 %v725
          %v740 = vpop.xlane.xlu0 %739
          %741 = vadd.xlane.f32.xlu0 %v726
          %v742 = vpop.xlane.xlu0 %741
          %p743 = scmp.eq.s32.totalorder %s29, 0
          // Predicated region
          $region95: #{discriminator_forward.1} parent=93 // pred_check
            %p744 = pneg %p743
          $region96: #{discriminator_forward.1} parent=93 // pred_check_branch
            %746 = sbr.rel (%p744) target = $region98
          $region97: #{discriminator_forward.1} parent=93 // pred_region
            %vm747 = vcmask 7168
            %748 = vst.msk [vmem:[#allocation2] sm:$0xff] %vm747, %v704
            %749 = vst.msk [vmem:[#allocation2 + $0x8] sm:$0xff] %vm747, %v706
            %750 = vst.msk [vmem:[#allocation2 + $0x10] sm:$0xff] %vm747, %v708
            %751 = vst.msk [vmem:[#allocation2 + $0x18] sm:$0xff] %vm747, %v710
            %752 = vst.msk [vmem:[#allocation2 + $0x20] sm:$0xff] %vm747, %v712
            %753 = vst.msk [vmem:[#allocation2 + $0x28] sm:$0xff] %vm747, %v714
            %754 = vst.msk [vmem:[#allocation2 + $0x30] sm:$0xff] %vm747, %v716
            %755 = vst.msk [vmem:[#allocation2 + $0x38] sm:$0xff] %vm747, %v718
            %756 = vst.msk [vmem:[#allocation3] sm:$0xff] %vm747, %v728
            %757 = vst.msk [vmem:[#allocation3 + $0x8] sm:$0xff] %vm747, %v730
            %758 = vst.msk [vmem:[#allocation3 + $0x10] sm:$0xff] %vm747, %v732
            %759 = vst.msk [vmem:[#allocation3 + $0x18] sm:$0xff] %vm747, %v734
            %760 = vst.msk [vmem:[#allocation3 + $0x20] sm:$0xff] %vm747, %v736
            %761 = vst.msk [vmem:[#allocation3 + $0x28] sm:$0xff] %vm747, %v738
            %762 = vst.msk [vmem:[#allocation3 + $0x30] sm:$0xff] %vm747, %v740
            %763 = vst.msk [vmem:[#allocation3 + $0x38] sm:$0xff] %vm747, %v742
          $region98: #{discriminator_forward.1} parent=93 // pred_fallthru
            _
          %p764 = scmp.ne.s32.totalorder %s29, 0
          // Predicated region
          $region99: #{discriminator_forward.1} parent=93 // pred_check
            %p765 = pneg %p764
          $region100: #{discriminator_forward.1} parent=93 // pred_check_branch
            %767 = sbr.rel (%p765) target = $region102
          $region101: #{discriminator_forward.1} parent=93 // pred_region
            %v768 = vld [vmem:[#allocation2] sm:$0xff]
            %v769 = vld [vmem:[#allocation2 + $0x8] sm:$0xff]
            %v770 = vld [vmem:[#allocation2 + $0x10] sm:$0xff]
            %v771 = vld [vmem:[#allocation2 + $0x18] sm:$0xff]
            %v772 = vld [vmem:[#allocation2 + $0x20] sm:$0xff]
            %v773 = vld [vmem:[#allocation2 + $0x28] sm:$0xff]
            %v774 = vld [vmem:[#allocation2 + $0x30] sm:$0xff]
            %v775 = vld [vmem:[#allocation2 + $0x38] sm:$0xff]
            %v776 = vadd.f32 %v768, %v704
            %v777 = vadd.f32 %v769, %v706
            %v778 = vadd.f32 %v770, %v708
            %v779 = vadd.f32 %v771, %v710
            %v780 = vadd.f32 %v772, %v712
            %v781 = vadd.f32 %v773, %v714
            %v782 = vadd.f32 %v774, %v716
            %v783 = vadd.f32 %v775, %v718
            %vm784 = vcmask 7168
            %785 = vst.msk [vmem:[#allocation2] sm:$0xff] %vm784, %v776
            %786 = vst.msk [vmem:[#allocation2 + $0x8] sm:$0xff] %vm784, %v777
            %787 = vst.msk [vmem:[#allocation2 + $0x10] sm:$0xff] %vm784, %v778
            %788 = vst.msk [vmem:[#allocation2 + $0x18] sm:$0xff] %vm784, %v779
            %789 = vst.msk [vmem:[#allocation2 + $0x20] sm:$0xff] %vm784, %v780
            %790 = vst.msk [vmem:[#allocation2 + $0x28] sm:$0xff] %vm784, %v781
            %791 = vst.msk [vmem:[#allocation2 + $0x30] sm:$0xff] %vm784, %v782
            %792 = vst.msk [vmem:[#allocation2 + $0x38] sm:$0xff] %vm784, %v783
            %v793 = vld [vmem:[#allocation3] sm:$0xff]
            %v794 = vld [vmem:[#allocation3 + $0x8] sm:$0xff]
            %v795 = vld [vmem:[#allocation3 + $0x10] sm:$0xff]
            %v796 = vld [vmem:[#allocation3 + $0x18] sm:$0xff]
            %v797 = vld [vmem:[#allocation3 + $0x20] sm:$0xff]
            %v798 = vld [vmem:[#allocation3 + $0x28] sm:$0xff]
            %v799 = vld [vmem:[#allocation3 + $0x30] sm:$0xff]
            %v800 = vld [vmem:[#allocation3 + $0x38] sm:$0xff]
            %v801 = vadd.f32 %v793, %v728
            %v802 = vadd.f32 %v794, %v730
            %v803 = vadd.f32 %v795, %v732
            %v804 = vadd.f32 %v796, %v734
            %v805 = vadd.f32 %v797, %v736
            %v806 = vadd.f32 %v798, %v738
            %v807 = vadd.f32 %v799, %v740
            %v808 = vadd.f32 %v800, %v742
            %809 = vst.msk [vmem:[#allocation3] sm:$0xff] %vm784, %v801
            %810 = vst.msk [vmem:[#allocation3 + $0x8] sm:$0xff] %vm784, %v802
            %811 = vst.msk [vmem:[#allocation3 + $0x10] sm:$0xff] %vm784, %v803
            %812 = vst.msk [vmem:[#allocation3 + $0x18] sm:$0xff] %vm784, %v804
            %813 = vst.msk [vmem:[#allocation3 + $0x20] sm:$0xff] %vm784, %v805
            %814 = vst.msk [vmem:[#allocation3 + $0x28] sm:$0xff] %vm784, %v806
            %815 = vst.msk [vmem:[#allocation3 + $0x30] sm:$0xff] %vm784, %v807
            %816 = vst.msk [vmem:[#allocation3 + $0x38] sm:$0xff] %vm784, %v808
          $region102: #{discriminator_forward.1} parent=93 // pred_fallthru
            _
          %p817 = scmp.eq.s32.totalorder %s29, 1
          // Predicated region
          $region103: #{discriminator_forward.1} parent=93 // pred_check
            %p818 = pneg %p817
          $region104: #{discriminator_forward.1} parent=93 // pred_check_branch
            %820 = sbr.rel (%p818) target = $region106
          $region105: #{discriminator_forward.1} parent=93 // pred_region
            %v821 = vld [vmem:[#allocation2] sm:$0xff]
            %v822 = vld [vmem:[#allocation2 + $0x8] sm:$0xff]
            %v823 = vld [vmem:[#allocation2 + $0x10] sm:$0xff]
            %v824 = vld [vmem:[#allocation2 + $0x18] sm:$0xff]
            %v825 = vld [vmem:[#allocation2 + $0x20] sm:$0xff]
            %v826 = vld [vmem:[#allocation2 + $0x28] sm:$0xff]
            %v827 = vld [vmem:[#allocation2 + $0x30] sm:$0xff]
            %v828 = vld [vmem:[#allocation2 + $0x38] sm:$0xff]
            %v829 = vmul.f32 %v821, 0.00390625
            %v830 = vmul.f32 %v822, 0.00390625
            %v831 = vmul.f32 %v823, 0.00390625
            %v832 = vmul.f32 %v824, 0.00390625
            %v833 = vmul.f32 %v825, 0.00390625
            %v834 = vmul.f32 %v826, 0.00390625
            %v835 = vmul.f32 %v827, 0.00390625
            %v836 = vmul.f32 %v828, 0.00390625
            %v837 = vld [vmem:[#allocation3] sm:$0xff]
            %v838 = vld [vmem:[#allocation3 + $0x8] sm:$0xff]
            %v839 = vld [vmem:[#allocation3 + $0x10] sm:$0xff]
            %v840 = vld [vmem:[#allocation3 + $0x18] sm:$0xff]
            %v841 = vld [vmem:[#allocation3 + $0x20] sm:$0xff]
            %v842 = vld [vmem:[#allocation3 + $0x28] sm:$0xff]
            %v843 = vld [vmem:[#allocation3 + $0x30] sm:$0xff]
            %v844 = vld [vmem:[#allocation3 + $0x38] sm:$0xff]
            %v845 = vmul.f32 %v837, 0.00390625
            %v846 = vmul.f32 %v838, 0.00390625
            %v847 = vmul.f32 %v839, 0.00390625
            %v848 = vmul.f32 %v840, 0.00390625
            %v849 = vmul.f32 %v841, 0.00390625
            %v850 = vmul.f32 %v842, 0.00390625
            %v851 = vmul.f32 %v843, 0.00390625
            %v852 = vmul.f32 %v844, 0.00390625
            %v853 = vmul.f32 %v829, %v829
            %v854 = vmul.f32 %v830, %v830
            %v855 = vmul.f32 %v831, %v831
            %v856 = vmul.f32 %v832, %v832
            %v857 = vmul.f32 %v833, %v833
            %v858 = vmul.f32 %v834, %v834
            %v859 = vmul.f32 %v835, %v835
            %v860 = vmul.f32 %v836, %v836
            %v861 = vsub.f32 %v845, %v853
            %v862 = vsub.f32 %v846, %v854
            %v863 = vsub.f32 %v847, %v855
            %v864 = vsub.f32 %v848, %v856
            %v865 = vsub.f32 %v849, %v857
            %v866 = vsub.f32 %v850, %v858
            %v867 = vsub.f32 %v851, %v859
            %v868 = vsub.f32 %v852, %v860
            %v869 = vmax.f32 %v861, 0.0
            %v870 = vmax.f32 %v862, 0.0
            %v871 = vmax.f32 %v863, 0.0
            %v872 = vmax.f32 %v864, 0.0
            %v873 = vmax.f32 %v865, 0.0
            %v874 = vmax.f32 %v866, 0.0
            %v875 = vmax.f32 %v867, 0.0
            %v876 = vmax.f32 %v868, 0.0
            %v877 = vld [vmem:[%s4] sm:$0xff]
            %v878 = vld [vmem:[%s4 + $0x8] sm:$0xff]
            %v879 = vld [vmem:[%s4 + $0x10] sm:$0xff]
            %v880 = vld [vmem:[%s4 + $0x18] sm:$0xff]
            %v881 = vld [vmem:[%s4 + $0x20] sm:$0xff]
            %v882 = vld [vmem:[%s4 + $0x28] sm:$0xff]
            %v883 = vld [vmem:[%s4 + $0x30] sm:$0xff]
            %v884 = vld [vmem:[%s4 + $0x38] sm:$0xff]
            %v885 = vadd.f32 %v869, 1e-05
            %v886 = vadd.f32 %v870, 1e-05
            %v887 = vadd.f32 %v871, 1e-05
            %v888 = vadd.f32 %v872, 1e-05
            %v889 = vadd.f32 %v873, 1e-05
            %v890 = vadd.f32 %v874, 1e-05
            %v891 = vadd.f32 %v875, 1e-05
            %v892 = vadd.f32 %v876, 1e-05
            %v893 = vrsqrt.pop %v885
            %v894 = vrsqrt.pop %v886
            %v895 = vrsqrt.pop %v887
            %v896 = vrsqrt.pop %v888
            %v897 = vrsqrt.pop %v889
            %v898 = vrsqrt.pop %v890
            %v899 = vrsqrt.pop %v891
            %v900 = vrsqrt.pop %v892
            %v901 = vmul.f32 %v877, %v893
            %v902 = vmul.f32 %v878, %v894
            %v903 = vmul.f32 %v879, %v895
            %v904 = vmul.f32 %v880, %v896
            %v905 = vmul.f32 %v881, %v897
            %v906 = vmul.f32 %v882, %v898
            %v907 = vmul.f32 %v883, %v899
            %v908 = vmul.f32 %v884, %v900
            %vm909 = vcmask 7168
            %910 = vst.msk [vmem:[#allocation4] sm:$0xff] %vm909, %v901
            %911 = vst.msk [vmem:[#allocation4 + $0x8] sm:$0xff] %vm909, %v902
            %912 = vst.msk [vmem:[#allocation4 + $0x10] sm:$0xff] %vm909, %v903
            %913 = vst.msk [vmem:[#allocation4 + $0x18] sm:$0xff] %vm909, %v904
            %914 = vst.msk [vmem:[#allocation4 + $0x20] sm:$0xff] %vm909, %v905
            %915 = vst.msk [vmem:[#allocation4 + $0x28] sm:$0xff] %vm909, %v906
            %916 = vst.msk [vmem:[#allocation4 + $0x30] sm:$0xff] %vm909, %v907
            %917 = vst.msk [vmem:[#allocation4 + $0x38] sm:$0xff] %vm909, %v908
            %v918 = vld [vmem:[%s5] sm:$0xff]
            %v919 = vld [vmem:[%s5 + $0x8] sm:$0xff]
            %v920 = vld [vmem:[%s5 + $0x10] sm:$0xff]
            %v921 = vld [vmem:[%s5 + $0x18] sm:$0xff]
            %v922 = vld [vmem:[%s5 + $0x20] sm:$0xff]
            %v923 = vld [vmem:[%s5 + $0x28] sm:$0xff]
            %v924 = vld [vmem:[%s5 + $0x30] sm:$0xff]
            %v925 = vld [vmem:[%s5 + $0x38] sm:$0xff]
            %v926 = vmul.f32 %v901, %v829
            %v927 = vmul.f32 %v902, %v830
            %v928 = vmul.f32 %v903, %v831
            %v929 = vmul.f32 %v904, %v832
            %v930 = vmul.f32 %v905, %v833
            %v931 = vmul.f32 %v906, %v834
            %v932 = vmul.f32 %v907, %v835
            %v933 = vmul.f32 %v908, %v836
            %v934 = vsub.f32 %v918, %v926
            %v935 = vsub.f32 %v919, %v927
            %v936 = vsub.f32 %v920, %v928
            %v937 = vsub.f32 %v921, %v929
            %v938 = vsub.f32 %v922, %v930
            %v939 = vsub.f32 %v923, %v931
            %v940 = vsub.f32 %v924, %v932
            %v941 = vsub.f32 %v925, %v933
            %942 = vst.msk [vmem:[#allocation5] sm:$0xff] %vm909, %v934
            %943 = vst.msk [vmem:[#allocation5 + $0x8] sm:$0xff] %vm909, %v935
            %944 = vst.msk [vmem:[#allocation5 + $0x10] sm:$0xff] %vm909, %v936
            %945 = vst.msk [vmem:[#allocation5 + $0x18] sm:$0xff] %vm909, %v937
            %946 = vst.msk [vmem:[#allocation5 + $0x20] sm:$0xff] %vm909, %v938
            %947 = vst.msk [vmem:[#allocation5 + $0x28] sm:$0xff] %vm909, %v939
            %948 = vst.msk [vmem:[#allocation5 + $0x30] sm:$0xff] %vm909, %v940
            %949 = vst.msk [vmem:[#allocation5 + $0x38] sm:$0xff] %vm909, %v941
          $region106: #{discriminator_forward.1} parent=93 // pred_fallthru
            _
        $region94: #{discriminator_forward.1} parent=85 // pred_fallthru
          _
        %p950 = scmp.eq.s32.totalorder %s28, 1
        // Predicated region
        $region107: #{discriminator_forward.1} parent=85 // pred_check
          %p951 = pneg %p950
        $region108: #{discriminator_forward.1} parent=85 // pred_check_branch
          %953 = sbr.rel (%p951) target = $region110
        $region109: #{discriminator_forward.1} parent=85 // pred_region
          %s954 = smul.u32 %s29, 128
          %s955 = sshra.s32 %s954, 7
          %s956 = sand.u32 %s954, 127
          %s957 = smul.addr %s955, 8
          %s958 = scalar_lea.vmem [#allocation6], %s957
          %v959 = vld [vmem:[%s958] sm:$0xff]
          %v960 = vld [vmem:[%s958 + $0x10] sm:$0xff]
          %v961 = vld [vmem:[%s958 + $0x20] sm:$0xff]
          %v962 = vld [vmem:[%s958 + $0x30] sm:$0xff]
          %v963 = vld [vmem:[%s958 + $0x40] sm:$0xff]
          %v964 = vld [vmem:[%s958 + $0x50] sm:$0xff]
          %v965 = vld [vmem:[%s958 + $0x60] sm:$0xff]
          %v966 = vld [vmem:[%s958 + $0x70] sm:$0xff]
          %v967 = vld [vmem:[#allocation4] sm:$0xff]
          %v968 = vld [vmem:[#allocation4 + $0x8] sm:$0xff]
          %v969 = vld [vmem:[#allocation4 + $0x10] sm:$0xff]
          %v970 = vld [vmem:[#allocation4 + $0x18] sm:$0xff]
          %v971 = vld [vmem:[#allocation4 + $0x20] sm:$0xff]
          %v972 = vld [vmem:[#allocation4 + $0x28] sm:$0xff]
          %v973 = vld [vmem:[#allocation4 + $0x30] sm:$0xff]
          %v974 = vld [vmem:[#allocation4 + $0x38] sm:$0xff]
          %976 = vset.pattern.permute.xlu0 0
          %977 = vperm.xlu0 %976, %v967
          %v978 = vpop.permute.xlu0 %977
          %981 = vset.pattern.permute.xlu0 0
          %982 = vperm.xlu0 %981, %v968
          %v983 = vpop.permute.xlu0 %982
          %986 = vset.pattern.permute.xlu0 0
          %987 = vperm.xlu0 %986, %v969
          %v988 = vpop.permute.xlu0 %987
          %991 = vset.pattern.permute.xlu0 0
          %992 = vperm.xlu0 %991, %v970
          %v993 = vpop.permute.xlu0 %992
          %996 = vset.pattern.permute.xlu0 0
          %997 = vperm.xlu0 %996, %v971
          %v998 = vpop.permute.xlu0 %997
          %1001 = vset.pattern.permute.xlu0 0
          %1002 = vperm.xlu0 %1001, %v972
          %v1003 = vpop.permute.xlu0 %1002
          %1006 = vset.pattern.permute.xlu0 0
          %1007 = vperm.xlu0 %1006, %v973
          %v1008 = vpop.permute.xlu0 %1007
          %1011 = vset.pattern.permute.xlu0 0
          %1012 = vperm.xlu0 %1011, %v974
          %v1013 = vpop.permute.xlu0 %1012
          %v1015 = vmul.f32 %v959, %v978
          %v1016 = vmul.f32 %v960, %v983
          %v1017 = vmul.f32 %v961, %v988
          %v1018 = vmul.f32 %v962, %v993
          %v1019 = vmul.f32 %v963, %v998
          %v1020 = vmul.f32 %v964, %v1003
          %v1021 = vmul.f32 %v965, %v1008
          %v1022 = vmul.f32 %v966, %v1013
          %v1023 = vld [vmem:[#allocation5] sm:$0xff]
          %v1024 = vld [vmem:[#allocation5 + $0x8] sm:$0xff]
          %v1025 = vld [vmem:[#allocation5 + $0x10] sm:$0xff]
          %v1026 = vld [vmem:[#allocation5 + $0x18] sm:$0xff]
          %v1027 = vld [vmem:[#allocation5 + $0x20] sm:$0xff]
          %v1028 = vld [vmem:[#allocation5 + $0x28] sm:$0xff]
          %v1029 = vld [vmem:[#allocation5 + $0x30] sm:$0xff]
          %v1030 = vld [vmem:[#allocation5 + $0x38] sm:$0xff]
          %1032 = vset.pattern.permute.xlu0 0
          %1033 = vperm.xlu0 %1032, %v1023
          %v1034 = vpop.permute.xlu0 %1033
          %1037 = vset.pattern.permute.xlu0 0
          %1038 = vperm.xlu0 %1037, %v1024
          %v1039 = vpop.permute.xlu0 %1038
          %1042 = vset.pattern.permute.xlu0 0
          %1043 = vperm.xlu0 %1042, %v1025
          %v1044 = vpop.permute.xlu0 %1043
          %1047 = vset.pattern.permute.xlu0 0
          %1048 = vperm.xlu0 %1047, %v1026
          %v1049 = vpop.permute.xlu0 %1048
          %1052 = vset.pattern.permute.xlu0 0
          %1053 = vperm.xlu0 %1052, %v1027
          %v1054 = vpop.permute.xlu0 %1053
          %1057 = vset.pattern.permute.xlu0 0
          %1058 = vperm.xlu0 %1057, %v1028
          %v1059 = vpop.permute.xlu0 %1058
          %1062 = vset.pattern.permute.xlu0 0
          %1063 = vperm.xlu0 %1062, %v1029
          %v1064 = vpop.permute.xlu0 %1063
          %1067 = vset.pattern.permute.xlu0 0
          %1068 = vperm.xlu0 %1067, %v1030
          %v1069 = vpop.permute.xlu0 %1068
          %v1071 = vadd.f32 %v1015, %v1034
          %v1072 = vadd.f32 %v1016, %v1039
          %v1073 = vadd.f32 %v1017, %v1044
          %v1074 = vadd.f32 %v1018, %v1049
          %v1075 = vadd.f32 %v1019, %v1054
          %v1076 = vadd.f32 %v1020, %v1059
          %v1077 = vadd.f32 %v1021, %v1064
          %v1078 = vadd.f32 %v1022, %v1069
          %vm1079 = vcmp.ge.f32.partialorder %v1071, 0.0
          %vm1080 = vcmp.ge.f32.partialorder %v1072, 0.0
          %vm1081 = vcmp.ge.f32.partialorder %v1073, 0.0
          %vm1082 = vcmp.ge.f32.partialorder %v1074, 0.0
          %vm1083 = vcmp.ge.f32.partialorder %v1075, 0.0
          %vm1084 = vcmp.ge.f32.partialorder %v1076, 0.0
          %vm1085 = vcmp.ge.f32.partialorder %v1077, 0.0
          %vm1086 = vcmp.ge.f32.partialorder %v1078, 0.0
          %v1087 = vmul.f32 %v1071, 0.2
          %v1088 = vmul.f32 %v1072, 0.2
          %v1089 = vmul.f32 %v1073, 0.2
          %v1090 = vmul.f32 %v1074, 0.2
          %v1091 = vmul.f32 %v1075, 0.2
          %v1092 = vmul.f32 %v1076, 0.2
          %v1093 = vmul.f32 %v1077, 0.2
          %v1094 = vmul.f32 %v1078, 0.2
          %v1095 = vsel %vm1079, %v1071, %v1087
          %v1096 = vsel %vm1080, %v1072, %v1088
          %v1097 = vsel %vm1081, %v1073, %v1089
          %v1098 = vsel %vm1082, %v1074, %v1090
          %v1099 = vsel %vm1083, %v1075, %v1091
          %v1100 = vsel %vm1084, %v1076, %v1092
          %v1101 = vsel %vm1085, %v1077, %v1093
          %v1102 = vsel %vm1086, %v1078, %v1094
          %v1103 = vld [vmem:[%s6] sm:$0x1]
          %v1104 = vld [vmem:[#allocation7] sm:$0x1]
          %1106 = vset.pattern.permute.xlu0 0
          %1107 = vperm.xlu0 %1106, %v1104
          %v1108 = vpop.permute.xlu0 %1107
          %v1110 = vlaneseq
          %v1111 = vshrl.u32 %v1110, 7
          %v1112 = vsub.s32 0, %v1111
          %v1113 = vrot.slane %v1108, %v1112
          %vm1114 = vcmask 523264
          %v1116 = vsel %vm1114, %v1103, 0
          %1118 = vmatprep.subr.mxu0 0.0
          %1119 = vmatpush1.msra.mxu0 %v1095
          %1120 = vmatprep.subr.mxu0 0.0
          %1121 = vmatpush1.msra.mxu0 %v1096
          %1122 = vmatprep.subr.mxu0 0.0
          %1123 = vmatpush1.msra.mxu0 %v1097
          %1124 = vmatprep.subr.mxu0 0.0
          %1125 = vmatpush1.msra.mxu0 %v1098
          %1126 = vmatprep.subr.mxu0 0.0
          %1127 = vmatpush1.msra.mxu0 %v1099
          %1128 = vmatprep.subr.mxu0 0.0
          %1129 = vmatpush1.msra.mxu0 %v1100
          %1130 = vmatprep.subr.mxu0 0.0
          %1131 = vmatpush1.msra.mxu0 %v1101
          %1132 = vmatprep.subr.mxu0 0.0
          %1133 = vmatpush1.msra.mxu0 %v1102
          %1134 = vmatprep.subr.mxu0 0.0
          %1135 = vmatpush1.msra.mxu0 0.0
          %1136 = vmatprep.subr.mxu0 0.0
          %1137 = vmatpush1.msra.mxu0 0.0
          %1138 = vmatprep.subr.mxu0 0.0
          %1139 = vmatpush1.msra.mxu0 0.0
          %1140 = vmatprep.subr.mxu0 0.0
          %1141 = vmatpush1.msra.mxu0 0.0
          %1142 = vmatprep.subr.mxu0 0.0
          %1143 = vmatpush1.msra.mxu0 0.0
          %1144 = vmatprep.subr.mxu0 0.0
          %1145 = vmatpush1.msra.mxu0 0.0
          %1146 = vmatprep.subr.mxu0 0.0
          %1147 = vmatpush1.msra.mxu0 0.0
          %1148 = vmatprep.subr.mxu0 0.0
          %1149 = vmatpush1.msra.mxu0 0.0
          %1150 = vmatprep.subr.mxu0 0.0
          %1151 = vmatpush1.msra.mxu0 0.0
          %1152 = vmatprep.subr.mxu0 0.0
          %1153 = vmatpush1.msra.mxu0 0.0
          %1154 = vmatprep.subr.mxu0 0.0
          %1155 = vmatpush1.msra.mxu0 0.0
          %1156 = vmatprep.subr.mxu0 0.0
          %1157 = vmatpush1.msra.mxu0 0.0
          %1158 = vmatprep.subr.mxu0 0.0
          %1159 = vmatpush1.msra.mxu0 0.0
          %1160 = vmatprep.subr.mxu0 0.0
          %1161 = vmatpush1.msra.mxu0 0.0
          %1162 = vmatprep.subr.mxu0 0.0
          %1163 = vmatpush1.msra.mxu0 0.0
          %1164 = vmatprep.subr.mxu0 0.0
          %1165 = vmatpush1.msra.mxu0 0.0
          %1166 = vmatprep.subr.mxu0 0.0
          %1167 = vmatpush1.msra.mxu0 0.0
          %1168 = vmatprep.subr.mxu0 0.0
          %1169 = vmatpush1.msra.mxu0 0.0
          %1170 = vmatprep.subr.mxu0 0.0
          %1171 = vmatpush1.msra.mxu0 0.0
          %1172 = vmatprep.subr.mxu0 0.0
          %1173 = vmatpush1.msra.mxu0 0.0
          %1174 = vmatprep.subr.mxu0 0.0
          %1175 = vmatpush1.msra.mxu0 0.0
          %1176 = vmatprep.subr.mxu0 0.0
          %1177 = vmatpush1.msra.mxu0 0.0
          %1178 = vmatprep.subr.mxu0 0.0
          %1179 = vmatpush1.msra.mxu0 0.0
          %1180 = vmatprep.subr.mxu0 0.0
          %1181 = vmatpush1.msra.mxu0 0.0
          %1182 = vmatprep.mubr.f32.mxu0 0.0
          %1183 = vmatmul.mubr.f32.gmra.mrb[0].mxu0 %v1116
          %v1184 = vpop.f32.mrb[0].mxu0
          %v1185 = vadd.f32 %v1113, %v1184
          %v1186 = vpop.f32.mrb[0].mxu0
          %1187 = vdwg.mxu0
          %v1188 = vsub.f32 0.0, %v1185
          %v1189 = vmul.f32 %v1188, 1.442695
          %v1190 = vpow.pop %v1189
          %v1191 = vadd.f32 %v1190, 1.0
          %v1192 = vrcp.pop %v1191
          %v1193 = vmul.f32 1.0, %v1192
          %1194 = vst [vmem:[%s383] sm:$0x1] %v1193
        $region110: #{discriminator_forward.1} parent=85 // pred_fallthru
          _
        %s1195 = sand.u32 %s232, 1
        %s1196 = scalar_lea.sflag [#allocation10], %s1195
        %s1197 = sand.u32 %s232, 1
        %s1198 = scalar_lea.vmem [#allocation9], %s1197
        // Predicated region
        $region111: #{discriminator_forward.1} parent=85 // pred_check
          %p1199 = pneg %p242
        $region112: #{discriminator_forward.1} parent=85 // pred_check_branch
          %1201 = sbr.rel (%p1199) target = $region114
        $region113: #{discriminator_forward.1} parent=85 // pred_region
          %s1202 = smul.u32 %s29, %s28
          %s1204 = ssub.s32 16, 16
          %1205 = vsyncadd %s1196, %s1204
          %s1206 = smul.addr %s1202, 16
          %s1207 = scalar_lea.hbm %s8, %s1206
          %s1209 = sshll.u32 %s1198, 4
          %s1210 = int_to_ptr.vmem [resolvable:$true] %s1209
          %1212 = dma.vmem_to_hbm [thread:$0]  %s1210, 16, %s1207, %s1196
        $region114: #{discriminator_forward.1} parent=85 // pred_fallthru
          _
      $region86: #{discriminator_forward.1} parent=5 // pred_fallthru
        _
      %p1213 = scmp.le.s32.totalorder 2, %s19
      // Predicated region
      $region115: #{discriminator_forward.1} parent=5 // pred_check
        %p1214 = pneg %p1213
      $region116: #{discriminator_forward.1} parent=5 // pred_check_branch
        %1216 = sbr.rel (%p1214) target = $region118
      $region117: #{discriminator_forward.1} parent=5 // pred_region
        %s1217 = ssub.s32 %s19, 2
        // Predicated region
        $region119: #{discriminator_forward.1} parent=117 // pred_check
          %p1218 = pneg %p248
        $region120: #{discriminator_forward.1} parent=117 // pred_check_branch
          %1220 = sbr.rel (%p1218) target = $region122
        $region121: #{discriminator_forward.1} parent=117 // pred_region
          %s1221 = sand.u32 %s233, 1
          %s1222 = scalar_lea.sflag [#allocation10], %s1221
          %s1223 = sand.u32 %s233, 1
          %s1224 = scalar_lea.vmem [#allocation9], %s1223
          %1225 = dma.done %s1222, 16
        $region122: #{discriminator_forward.1} parent=117 // pred_fallthru
          _
      $region118: #{discriminator_forward.1} parent=5 // pred_fallthru
        _
    $region6: #{discriminator_forward.1} parent=1 // loop_footer
      %s23 = sadd.s32 1, %s19
    $region7: #{discriminator_forward.1} parent=1 // loop_footer_branch
      %18 = sbr.rel target = $region3
    $region8: #{discriminator_forward.1} parent=1 // loop_exit
      _
    %1226 = vsyncpa [#allocation10], 1
    %s1227 = scalar_lea.sflag [#allocation10], 1
    %1228 = vsyncpa %s1227, 1

</llo_original>
